<compile_context>
chip_gen: v7x
topology: tpu7x:2x2x1
jax: 0.10.0
libtpu: 0.0.40
codegen_flags: <defaults>
</compile_context>

<pallas_src>
import functools
import math

import jax
import jax.numpy as jnp
from jax import lax
from jax.experimental import pallas as pl
from jax.experimental.pallas import tpu as pltpu


def _cycle_embedding_kernel(block_cycles, cycle_size, vocab,
                            tok_ref, eps_ref, table_ref, o_ref):
    rows = block_cycles * cycle_size

    tok = tok_ref[...]                                    # (rows, 1) int32 token ids
    tbl = table_ref[...]                                  # (V, H)   embedding table

    # Embedding lookup (emb + the "local" half of transfer0_1) as a one-hot matmul
    # on the MXU: onehot[r, v] = (tok[r] == v).  HIGHEST precision keeps the f32
    # table values (one-hot selection) effectively exact.
    onehot = (lax.broadcasted_iota(jnp.int32, (rows, vocab), 1) == tok)
    h = jnp.dot(onehot.astype(tbl.dtype), tbl,
                preferred_element_type=jnp.float32,
                precision=lax.Precision.HIGHEST)          # (rows, H) f32

    # Split rows into (cycle, atom) and take the per-cycle sum ("cycle_sum" half).
    h3 = h.reshape(block_cycles, cycle_size, h.shape[-1])  # (TC, K, H)
    s = jnp.sum(h3, axis=1, keepdims=True)                 # (TC, 1, H)

    eps = eps_ref[0]                                        # SMEM scalar
    # (1 + eps) * x[:, :c] + x[:, c:]
    o_ref[...] = ((1.0 + eps) * h3 + s).astype(o_ref.dtype)


def cycle_embedding(x_ids, node2cycle, emb_table, epsilon, *, block_cycles=None):
    """
    x_ids:      int32 [N]      node token ids (input `x` of the module)
    node2cycle: int32 [C, K]   node index for each atom of each cycle
    emb_table:  f32   [V, H]   Embedding weight (node_emb)
    epsilon:    f32   scalar   learnable epsilon parameter
    returns:    f32   [C*K, H]
    """
    C, K = node2cycle.shape
    V, H = emb_table.shape

    # Fuse the double indirection host-side: token id per cycle-atom.
    tok = jnp.take(x_ids.astype(jnp.int32), node2cycle.astype(jnp.int32),
                   axis=0)                                  # (C, K)

    if block_cycles is None:
        # Target ~512 atoms per grid step (fills the MXU nicely on v6e/v7x).
        block_cycles = max(1, min(C, max(1, 512 // K)))
    # The token block is (block_cycles*K, 1): its sublane dim must be a multiple
    # of 8 (unless it spans the full array), so round block_cycles up accordingly.
    sub = 8 // math.gcd(K, 8)
    block_cycles = ((block_cycles + sub - 1) // sub) * sub

    num_blocks = -(-C // block_cycles)
    Cp = num_blocks * block_cycles
    if Cp != C:
        # Pad with token 0 (a valid id); padded cycles are sliced off below.
        tok = jnp.pad(tok, ((0, Cp - C), (0, 0)))

    rows = block_cycles * K
    tok2d = tok.reshape(Cp * K, 1)
    eps1d = jnp.asarray(epsilon, jnp.float32).reshape(1)

    kernel = functools.partial(_cycle_embedding_kernel, block_cycles, K, V)

    # Raise the scoped VMEM limit only when the (double-buffered) table plus the
    # in-flight tiles actually need it; keep compiler defaults for small tables.
    itemsize = jnp.dtype(emb_table.dtype).itemsize
    vmem_est = 2 * V * H * itemsize + 8 * rows * H * 4 + (2 << 20)
    cp_kwargs = dict(dimension_semantics=("parallel",))
    if vmem_est > (32 << 20):
        cp_kwargs["vmem_limit_bytes"] = int(min(vmem_est, 96 << 20))

    out = pl.pallas_call(
        kernel,
        out_shape=jax.ShapeDtypeStruct((Cp, K, H), emb_table.dtype),
        grid=(num_blocks,),
        in_specs=[
            pl.BlockSpec((rows, 1), lambda i: (i, 0)),              # token ids
            pl.BlockSpec(memory_space=pltpu.MemorySpace.SMEM),      # epsilon
            pl.BlockSpec((V, H), lambda i: (0, 0)),                 # emb table (resident)
        ],
        out_specs=pl.BlockSpec((block_cycles, K, H), lambda i: (i, 0, 0)),
        compiler_params=pltpu.CompilerParams(**cp_kwargs),
    )(tok2d, eps1d, emb_table)

    if Cp != C:
        out = out[:C]
    return out.reshape(C * K, H)


if __name__ == "__main__":
    key = jax.random.PRNGKey(0)
    V, H = 48, 128        # vocab, hidden_dim
    N = 40                # number of nodes
    C, K = 50, 8          # number of cycles (deliberately not a block multiple), cycle size

    k1, k2, k3 = jax.random.split(key, 3)
    emb_table = jax.random.normal(k1, (V, H), jnp.float32)              # node_emb weight
    x_ids = jax.random.randint(k2, (N,), 0, V, dtype=jnp.int32)         # forward input x
    node2cycle = jax.random.randint(k3, (C, K), 0, N, dtype=jnp.int32)  # TransferData1
    epsilon = jnp.float32(0.25)                                          # Parameter(eps)

    out = jax.block_until_ready(
        cycle_embedding(x_ids, node2cycle, emb_table, epsilon, block_cycles=16))

    # Pure-JAX reference of the module forward.
    emb_x = emb_table[x_ids]                  # emb(x)          [N, H]
    h = emb_x[node2cycle]                     # local transfer  [C, K, H]
    ref = ((1.0 + epsilon) * h + h.sum(axis=1, keepdims=True)).reshape(C * K, H)

    assert out.shape == (C * K, H)
    assert jnp.allclose(out, ref, atol=1e-5, rtol=1e-5)
    print("KERNEL_OK")
</pallas_src>

<mosaic_0001>
module attributes {stable_mosaic.version = 11 : i64} {
  func.func @_cycle_embedding_kernel(%arg0: i32, %arg1: memref<128x1xi32, #tpu.memory_space<vmem>>, %arg2: memref<1xf32, #tpu.memory_space<smem>>, %arg3: memref<48x128xf32, #tpu.memory_space<vmem>>, %arg4: memref<16x8x128xf32, #tpu.memory_space<vmem>>) attributes {dimension_semantics = [#tpu.dimension_semantics<parallel>], iteration_bounds = array<i64: 4>, scalar_prefetch = 0 : i64, scratch_operands = 0 : i64, tpu.core_type = #tpu.core_type<tc>, window_params = [{transform_indices = @transform_0, window_bounds = array<i64: 128, 1>}, {transform_indices = @transform_1, window_bounds = array<i64: 1>}, {pipeline_mode = #tpu.pipeline_mode<synchronous>, transform_indices = @transform_2, window_bounds = array<i64: 48, 128>}, {transform_indices = @transform_3, window_bounds = array<i64: 16, 8, 128>}]} {
    %c0 = arith.constant 0 : index
    %c0_0 = arith.constant 0 : index
    %0 = vector.load %arg1[%c0, %c0_0] : memref<128x1xi32, #tpu.memory_space<vmem>>, vector<128x1xi32>
    %c0_1 = arith.constant 0 : index
    %c0_2 = arith.constant 0 : index
    %1 = vector.load %arg3[%c0_1, %c0_2] : memref<48x128xf32, #tpu.memory_space<vmem>>, vector<48x128xf32>
    %2 = tpu.iota {dimensions = array<i32: 1>} : vector<128x48xi32>
    %3 = vector.broadcast %0 : vector<128x1xi32> to vector<128x48xi32>
    %4 = arith.cmpi eq, %2, %3 : vector<128x48xi32>
    %5 = arith.extui %4 : vector<128x48xi1> to vector<128x48xi32>
    %6 = arith.sitofp %5 : vector<128x48xi32> to vector<128x48xf32>
    %cst = arith.constant dense<0.000000e+00> : vector<128x128xf32>
    %7 = tpu.matmul %6, %1, %cst {dimension_numbers = #tpu.dot_dimension_numbers<[1], [0], [0], [1], [0, 0, 1, 1], [], []>, precision = #tpu.contract_precision<fp32>} : vector<128x48xf32>, vector<48x128xf32>, vector<128x128xf32> -> vector<128x128xf32>
    %8 = vector.shape_cast %7 : vector<128x128xf32> to vector<16x8x128xf32>
    %cst_3 = arith.constant dense<0.000000e+00> : vector<16x128xf32>
    %9 = vector.multi_reduction <add>, %8, %cst_3 [1] : vector<16x8x128xf32> to vector<16x128xf32>
    %10 = vector.shape_cast %9 : vector<16x128xf32> to vector<16x1x128xf32>
    %c0_4 = arith.constant 0 : index
    %11 = memref.load %arg2[%c0_4] : memref<1xf32, #tpu.memory_space<smem>>
    %cst_5 = arith.constant 1.000000e+00 : f32
    %12 = arith.addf %cst_5, %11 : f32
    %13 = vector.broadcast %12 : f32 to vector<16x8x128xf32>
    %14 = arith.mulf %13, %8 : vector<16x8x128xf32>
    %15 = vector.broadcast %10 : vector<16x1x128xf32> to vector<16x8x128xf32>
    %16 = arith.addf %14, %15 : vector<16x8x128xf32>
    %c0_6 = arith.constant 0 : index
    %c0_7 = arith.constant 0 : index
    %c0_8 = arith.constant 0 : index
    %17 = vector.load %arg4[%c0_6, %c0_7, %c0_8] : memref<16x8x128xf32, #tpu.memory_space<vmem>>, vector<16x8x128xf32>
    tpu.vector_store %arg4[%c0_6, %c0_7, %c0_8], %16 {strides = array<i32>} : memref<16x8x128xf32, #tpu.memory_space<vmem>>, vector<16x8x128xf32>,
    return
  }
  func.func @transform_0(%arg0: i32) -> (i32, i32) {
    %c0_i32 = arith.constant 0 : i32
    %c0_i32_0 = arith.constant 0 : i32
    return %arg0, %c0_i32 : i32, i32
  }
  func.func @transform_1(%arg0: i32) -> i32 {
    %c0_i32 = arith.constant 0 : i32
    %c0_i32_0 = arith.constant 0 : i32
    return %c0_i32 : i32
  }
  func.func @transform_2(%arg0: i32) -> (i32, i32) {
    %c0_i32 = arith.constant 0 : i32
    %c0_i32_0 = arith.constant 0 : i32
    %c0_i32_1 = arith.constant 0 : i32
    return %c0_i32, %c0_i32_0 : i32, i32
  }
  func.func @transform_3(%arg0: i32) -> (i32, i32, i32) {
    %c0_i32 = arith.constant 0 : i32
    %c0_i32_0 = arith.constant 0 : i32
    %c0_i32_1 = arith.constant 0 : i32
    return %arg0, %c0_i32, %c0_i32_0 : i32, i32, i32
  }
}

</mosaic_0001>

<llo_original>
// kernel: tpu_custom_call.1
$region0: #{tpu_custom_call.1}
  #allocation0 [shape = 'u32[]', space=smem, size = 0x4, offset = 0x4, fixed_abs, tag = 'smem constant byte address 0x4 - core index']
  #allocation1 [shape = 'u32[144,128]{1,0:T(1,128)}', space=vmem, size = 0x12000, scoped, tag = 'internal scratch']
  #allocation2 [shape = 'f32[1]{0:T(128)S(6)}', space=smem, size = 0x200, scoped, tag = 'scoped memory for tpu_custom_call.1']
  %s0 = inlined_call_operand.vmem [shape: s32[512,1], index: 0, kind: input, shape index: {}]
  %s1 = inlined_call_operand.<no memory space> [shape: f32[1], index: 1, kind: input, shape index: {}]
  %s2 = inlined_call_operand.vmem [shape: f32[48,128], index: 2, kind: input, shape index: {}]
  %s3 = inlined_call_operand.hbm [shape: f32[64,8,128], index: 3, kind: output, shape index: {}]
  %s4 = sld [smem:[#allocation0]]
  $region45: #{tpu_custom_call.1} parent=0
    _
  %s6 = ssub.s32 1, %s4
  %s7 = scalar_select 0, %s6, %s4
  %8 = sst [smem:[#allocation2]] %s1
  $region1: #{tpu_custom_call.1} parent=0
    #allocation3 [shape = 'u8[131072]{0}', space=vmem, size = 0x20000, scoped, tag = 'output window, operand 0']
    #allocation4 [shape = 's32[2]{0}', space=sflag, size = 0x8, scoped, tag = 'scoped memory for tpu_custom_call.1']
    %9 = vsyncpa [#allocation4], 0
    %s10 = scalar_lea.sflag [#allocation4], 1
    %11 = vsyncpa %s10, 0
    loop: start=0, step=1, limit=6
    $region2: #{tpu_custom_call.1} parent=1 // loop_pre_header
      _
    $region3: #{tpu_custom_call.1} parent=1 // loop_header
      %s13 = sphi 0, %s17
      %p14 = scmp.ge.s32.totalorder %s13, 6
      %s23 = sphi 0, %s25
      %s26 = sphi 0, %s23
      %s27 = sphi 0, %s26
      %s43 = sphi 0, %s27
      %s47 = sphi 0, %s47
      %s49 = sphi 0, %s47
      %s50 = sphi 0, %s49
      %s64 = sphi 0, %s50
      %s68 = sphi 0, %s68
      %s70 = sphi 0, %s68
      %s71 = sphi 0, %s70
      %s85 = sphi 0, %s71
      %s91 = sphi 0, %s93
      %s94 = sphi 0, %s91
      %s95 = sphi 0, %s94
      %s111 = sphi 0, %s95
    $region4: #{tpu_custom_call.1} parent=1 // loop_header_branch
      %16 = sbr.rel (%p14) target = $region8
    $region5: #{tpu_custom_call.1} parent=1 // loop_body
      %s18 = ssub.s32 %s13, 1
      %s19 = ssub.s32 %s13, 2
      %s20 = sadd.s32 %s13, 1
      %s21 = ssub.s32 %s13, %s20
      %p22 = scmp.eq.s32.totalorder %s21, 0
      %s24 = sadd.s32 %s23, 1
      %s25 = scalar_select %p22, %s23, %s24
      %p28 = pneg %p22
      %p29 = scmp.eq.s32.totalorder %s13, 3
      %p30 = por %p28, %p29
      %p31 = scmp.ne.s32.totalorder %s23, %s26
      %p32 = scmp.eq.s32.totalorder %s13, 0
      %p33 = por %p31, %p32
      %p34 = scmp.ne.s32.totalorder %s23, %s26
      %p35 = scmp.eq.s32.totalorder %s18, 3
      %p36 = por %p34, %p35
      %p37 = scmp.ne.s32.totalorder %s26, %s27
      %p38 = scmp.eq.s32.totalorder %s18, 0
      %p39 = por %p37, %p38
      %p40 = scmp.ne.s32.totalorder %s26, %s27
      %p41 = scmp.eq.s32.totalorder %s19, 3
      %p42 = por %p40, %p41
      %p44 = scmp.ne.s32.totalorder %s27, %s43
      %p45 = scmp.eq.s32.totalorder %s19, 0
      %p46 = por %p44, %p45
      %s48 = sadd.s32 %s47, 1
      %p51 = scmp.eq.s32.totalorder %s13, 3
      %p52 = scmp.ne.s32.totalorder %s47, %s49
      %p53 = scmp.eq.s32.totalorder %s13, 0
      %p54 = por %p52, %p53
      %p55 = scmp.ne.s32.totalorder %s47, %s49
      %p56 = scmp.eq.s32.totalorder %s18, 3
      %p57 = por %p55, %p56
      %p58 = scmp.ne.s32.totalorder %s49, %s50
      %p59 = scmp.eq.s32.totalorder %s18, 0
      %p60 = por %p58, %p59
      %p61 = scmp.ne.s32.totalorder %s49, %s50
      %p62 = scmp.eq.s32.totalorder %s19, 3
      %p63 = por %p61, %p62
      %p65 = scmp.ne.s32.totalorder %s50, %s64
      %p66 = scmp.eq.s32.totalorder %s19, 0
      %p67 = por %p65, %p66
      %s69 = sadd.s32 %s68, 1
      %p72 = scmp.eq.s32.totalorder %s13, 3
      %p73 = scmp.ne.s32.totalorder %s68, %s70
      %p74 = scmp.eq.s32.totalorder %s13, 0
      %p75 = por %p73, %p74
      %p76 = scmp.ne.s32.totalorder %s68, %s70
      %p77 = scmp.eq.s32.totalorder %s18, 3
      %p78 = por %p76, %p77
      %p79 = scmp.ne.s32.totalorder %s70, %s71
      %p80 = scmp.eq.s32.totalorder %s18, 0
      %p81 = por %p79, %p80
      %p82 = scmp.ne.s32.totalorder %s70, %s71
      %p83 = scmp.eq.s32.totalorder %s19, 3
      %p84 = por %p82, %p83
      %p86 = scmp.ne.s32.totalorder %s71, %s85
      %p87 = scmp.eq.s32.totalorder %s19, 0
      %p88 = por %p86, %p87
      %s89 = ssub.s32 %s13, %s20
      %p90 = scmp.eq.s32.totalorder %s89, 0
      %s92 = sadd.s32 %s91, 1
      %s93 = scalar_select %p90, %s91, %s92
      %p96 = pneg %p90
      %p97 = scmp.eq.s32.totalorder %s13, 3
      %p98 = por %p96, %p97
      %p99 = scmp.ne.s32.totalorder %s91, %s94
      %p100 = scmp.eq.s32.totalorder %s13, 0
      %p101 = por %p99, %p100
      %p102 = scmp.ne.s32.totalorder %s91, %s94
      %p103 = scmp.eq.s32.totalorder %s18, 3
      %p104 = por %p102, %p103
      %p105 = scmp.ne.s32.totalorder %s94, %s95
      %p106 = scmp.eq.s32.totalorder %s18, 0
      %p107 = por %p105, %p106
      %p108 = scmp.ne.s32.totalorder %s94, %s95
      %p109 = scmp.eq.s32.totalorder %s19, 3
      %p110 = por %p108, %p109
      %p112 = scmp.ne.s32.totalorder %s95, %s111
      %p113 = scmp.eq.s32.totalorder %s19, 0
      %p114 = por %p112, %p113
      %p115 = scmp.le.s32.totalorder 1, %s13
      %p116 = scmp.lt.s32.totalorder %s13, 5
      %p117 = pnand %p115, %p116
      %p118 = pneg %p117
      // Predicated region
      $region9: #{tpu_custom_call.1} parent=5 // pred_check
        _
      $region10: #{tpu_custom_call.1} parent=5 // pred_check_branch
        %120 = sbr.rel (%p117) target = $region12
      $region11: #{tpu_custom_call.1} parent=5 // pred_region
        %s121 = ssub.s32 %s13, 1
        // Predicated region
        $region13: #{tpu_custom_call.1} parent=11 // pred_check
          %p122 = pneg %p60
        $region14: #{tpu_custom_call.1} parent=11 // pred_check_branch
          %124 = sbr.rel (%p122) target = $region16
        $region15: #{tpu_custom_call.1} parent=11 // pred_region
          _
        $region16: #{tpu_custom_call.1} parent=11 // pred_fallthru
          _
        // Predicated region
        $region17: #{tpu_custom_call.1} parent=11 // pred_check
          %p125 = pneg %p81
        $region18: #{tpu_custom_call.1} parent=11 // pred_check_branch
          %127 = sbr.rel (%p125) target = $region20
        $region19: #{tpu_custom_call.1} parent=11 // pred_region
          _
        $region20: #{tpu_custom_call.1} parent=11 // pred_fallthru
          _
      $region12: #{tpu_custom_call.1} parent=5 // pred_fallthru
        _
      %p128 = scmp.lt.s32.totalorder %s13, 4
      // Predicated region
      $region21: #{tpu_custom_call.1} parent=5 // pred_check
        %p129 = pneg %p128
      $region22: #{tpu_custom_call.1} parent=5 // pred_check_branch
        %131 = sbr.rel (%p129) target = $region24
      $region23: #{tpu_custom_call.1} parent=5 // pred_region
        // Predicated region
        $region25: #{tpu_custom_call.1} parent=23 // pred_check
          %p132 = pneg %p33
        $region26: #{tpu_custom_call.1} parent=23 // pred_check_branch
          %134 = sbr.rel (%p132) target = $region28
        $region27: #{tpu_custom_call.1} parent=23 // pred_region
          %s135 = smul.u32 16, %s13
          %p136 = scmp.lt.s32.totalorder %s135, 63
          %s137 = scalar_select %p136, %s135, 63
          %s138 = smul.addr %s137, 8
          %s139 = scalar_lea.vmem %s0, %s138
          %s140 = smul.u32 16, %s13
        $region28: #{tpu_custom_call.1} parent=23 // pred_fallthru
          _
      $region24: #{tpu_custom_call.1} parent=5 // pred_fallthru
        _
      %p141 = scmp.le.s32.totalorder 1, %s13
      %p142 = scmp.lt.s32.totalorder %s13, 5
      %p143 = pnand %p141, %p142
      %p144 = pneg %p143
      // Predicated region
      $region29: #{tpu_custom_call.1} parent=5 // pred_check
        _
      $region30: #{tpu_custom_call.1} parent=5 // pred_check_branch
        %146 = sbr.rel (%p143) target = $region32
      $region31: #{tpu_custom_call.1} parent=5 // pred_region
        %s147 = ssub.s32 %s13, 1
        %s148 = smul.u32 16, %s18
        %p149 = scmp.lt.s32.totalorder %s148, 63
        %s150 = scalar_select %p149, %s148, 63
        %s151 = smul.addr %s150, 8
        %s152 = scalar_lea.vmem %s0, %s151
        %p153 = pneg %p39
        %p154 = pneg %p36
        %p155 = pneg %p60
        %p156 = pneg %p57
        %p157 = pneg %p81
        %p158 = pneg %p78
        %p159 = pneg %p107
        %p160 = pneg %p104
        %s161 = sand.u32 %s94, 1
        %s162 = scalar_lea.sflag [#allocation4], %s161
        %s163 = sand.u32 %s94, 1
        %s164 = smul.addr %s163, 128
        %s165 = scalar_lea.vmem [#allocation3], %s164
        %s166 = smul.u32 16, %s18
        %p167 = scmp.lt.s32.totalorder %s166, 63
        %s168 = scalar_select %p167, %s166, 63
        %s169 = smul.addr %s168, 8
        %s170 = scalar_lea.vmem %s0, %s169
        %s171 = smul.u32 16, %s18
        %s172 = smul.u32 16, %s18
        %v173 = vld [vmem:[%s170] sm:$0xff]
        %v174 = vld [vmem:[%s170 + $0x8] sm:$0xff]
        %v175 = vld [vmem:[%s170 + $0x10] sm:$0xff]
        %v176 = vld [vmem:[%s170 + $0x18] sm:$0xff]
        %v177 = vld [vmem:[%s170 + $0x20] sm:$0xff]
        %v178 = vld [vmem:[%s170 + $0x28] sm:$0xff]
        %v179 = vld [vmem:[%s170 + $0x30] sm:$0xff]
        %v180 = vld [vmem:[%s170 + $0x38] sm:$0xff]
        %v181 = vld [vmem:[%s170 + $0x40] sm:$0xff]
        %v182 = vld [vmem:[%s170 + $0x48] sm:$0xff]
        %v183 = vld [vmem:[%s170 + $0x50] sm:$0xff]
        %v184 = vld [vmem:[%s170 + $0x58] sm:$0xff]
        %v185 = vld [vmem:[%s170 + $0x60] sm:$0xff]
        %v186 = vld [vmem:[%s170 + $0x68] sm:$0xff]
        %v187 = vld [vmem:[%s170 + $0x70] sm:$0xff]
        %v188 = vld [vmem:[%s170 + $0x78] sm:$0xff]
        %v189 = vld [vmem:[%s2] sm:$0xff]
        %v190 = vld [vmem:[%s2 + $0x8] sm:$0xff]
        %v191 = vld [vmem:[%s2 + $0x10] sm:$0xff]
        %v192 = vld [vmem:[%s2 + $0x18] sm:$0xff]
        %v193 = vld [vmem:[%s2 + $0x20] sm:$0xff]
        %v194 = vld [vmem:[%s2 + $0x28] sm:$0xff]
        %v195 = vlaneseq
        %v196 = vand.u32 %v195, 127
        %197 = vset.pattern.permute.xlu0 0
        %198 = vperm.xlu0 %197, %v173
        %v199 = vpop.permute.xlu0 %198
        %200 = vset.pattern.permute.xlu0 0
        %201 = vperm.xlu0 %200, %v174
        %v202 = vpop.permute.xlu0 %201
        %203 = vset.pattern.permute.xlu0 0
        %204 = vperm.xlu0 %203, %v175
        %v205 = vpop.permute.xlu0 %204
        %206 = vset.pattern.permute.xlu0 0
        %207 = vperm.xlu0 %206, %v176
        %v208 = vpop.permute.xlu0 %207
        %209 = vset.pattern.permute.xlu0 0
        %210 = vperm.xlu0 %209, %v177
        %v211 = vpop.permute.xlu0 %210
        %212 = vset.pattern.permute.xlu0 0
        %213 = vperm.xlu0 %212, %v178
        %v214 = vpop.permute.xlu0 %213
        %215 = vset.pattern.permute.xlu0 0
        %216 = vperm.xlu0 %215, %v179
        %v217 = vpop.permute.xlu0 %216
        %218 = vset.pattern.permute.xlu0 0
        %219 = vperm.xlu0 %218, %v180
        %v220 = vpop.permute.xlu0 %219
        %221 = vset.pattern.permute.xlu0 0
        %222 = vperm.xlu0 %221, %v181
        %v223 = vpop.permute.xlu0 %222
        %224 = vset.pattern.permute.xlu0 0
        %225 = vperm.xlu0 %224, %v182
        %v226 = vpop.permute.xlu0 %225
        %227 = vset.pattern.permute.xlu0 0
        %228 = vperm.xlu0 %227, %v183
        %v229 = vpop.permute.xlu0 %228
        %230 = vset.pattern.permute.xlu0 0
        %231 = vperm.xlu0 %230, %v184
        %v232 = vpop.permute.xlu0 %231
        %233 = vset.pattern.permute.xlu0 0
        %234 = vperm.xlu0 %233, %v185
        %v235 = vpop.permute.xlu0 %234
        %236 = vset.pattern.permute.xlu0 0
        %237 = vperm.xlu0 %236, %v186
        %v238 = vpop.permute.xlu0 %237
        %239 = vset.pattern.permute.xlu0 0
        %240 = vperm.xlu0 %239, %v187
        %v241 = vpop.permute.xlu0 %240
        %242 = vset.pattern.permute.xlu0 0
        %243 = vperm.xlu0 %242, %v188
        %v244 = vpop.permute.xlu0 %243
        %vm245 = vcmp.eq.s32.totalorder %v196, %v199
        %vm246 = vcmp.eq.s32.totalorder %v196, %v202
        %vm247 = vcmp.eq.s32.totalorder %v196, %v205
        %vm248 = vcmp.eq.s32.totalorder %v196, %v208
        %vm249 = vcmp.eq.s32.totalorder %v196, %v211
        %vm250 = vcmp.eq.s32.totalorder %v196, %v214
        %vm251 = vcmp.eq.s32.totalorder %v196, %v217
        %vm252 = vcmp.eq.s32.totalorder %v196, %v220
        %vm253 = vcmp.eq.s32.totalorder %v196, %v223
        %vm254 = vcmp.eq.s32.totalorder %v196, %v226
        %vm255 = vcmp.eq.s32.totalorder %v196, %v229
        %vm256 = vcmp.eq.s32.totalorder %v196, %v232
        %vm257 = vcmp.eq.s32.totalorder %v196, %v235
        %vm258 = vcmp.eq.s32.totalorder %v196, %v238
        %vm259 = vcmp.eq.s32.totalorder %v196, %v241
        %vm260 = vcmp.eq.s32.totalorder %v196, %v244
        %v261 = vsel %vm245, 1, 0
        %v262 = vsel %vm246, 1, 0
        %v263 = vsel %vm247, 1, 0
        %v264 = vsel %vm248, 1, 0
        %v265 = vsel %vm249, 1, 0
        %v266 = vsel %vm250, 1, 0
        %v267 = vsel %vm251, 1, 0
        %v268 = vsel %vm252, 1, 0
        %v269 = vsel %vm253, 1, 0
        %v270 = vsel %vm254, 1, 0
        %v271 = vsel %vm255, 1, 0
        %v272 = vsel %vm256, 1, 0
        %v273 = vsel %vm257, 1, 0
        %v274 = vsel %vm258, 1, 0
        %v275 = vsel %vm259, 1, 0
        %v276 = vsel %vm260, 1, 0
        %v277 = vcvt.s32.f32 %v261
        %v278 = vcvt.s32.f32 %v262
        %v279 = vcvt.s32.f32 %v263
        %v280 = vcvt.s32.f32 %v264
        %v281 = vcvt.s32.f32 %v265
        %v282 = vcvt.s32.f32 %v266
        %v283 = vcvt.s32.f32 %v267
        %v284 = vcvt.s32.f32 %v268
        %v285 = vcvt.s32.f32 %v269
        %v286 = vcvt.s32.f32 %v270
        %v287 = vcvt.s32.f32 %v271
        %v288 = vcvt.s32.f32 %v272
        %v289 = vcvt.s32.f32 %v273
        %v290 = vcvt.s32.f32 %v274
        %v291 = vcvt.s32.f32 %v275
        %v292 = vcvt.s32.f32 %v276
        %vm293 = vcmask 392192
        %v295 = vsel %vm293, %v277, 0
        %v298 = vsel %vm293, %v278, 0
        %v301 = vsel %vm293, %v279, 0
        %v304 = vsel %vm293, %v280, 0
        %v307 = vsel %vm293, %v281, 0
        %v310 = vsel %vm293, %v282, 0
        %v313 = vsel %vm293, %v283, 0
        %v316 = vsel %vm293, %v284, 0
        %v319 = vsel %vm293, %v285, 0
        %v322 = vsel %vm293, %v286, 0
        %v325 = vsel %vm293, %v287, 0
        %v328 = vsel %vm293, %v288, 0
        %v331 = vsel %vm293, %v289, 0
        %v334 = vsel %vm293, %v290, 0
        %v337 = vsel %vm293, %v291, 0
        %v340 = vsel %vm293, %v292, 0
        %342 = vmatprep.subr.mxu0 0.0
        %v343 = vand.u32 %v189, 4294901760
        %344 = vmatpush1.msra.mxu0 %v343
        %345 = vmatprep.subr.mxu0 0.0
        %v346 = vand.u32 %v190, 4294901760
        %347 = vmatpush1.msra.mxu0 %v346
        %348 = vmatprep.subr.mxu0 0.0
        %v349 = vand.u32 %v191, 4294901760
        %350 = vmatpush1.msra.mxu0 %v349
        %351 = vmatprep.subr.mxu0 0.0
        %v352 = vand.u32 %v192, 4294901760
        %353 = vmatpush1.msra.mxu0 %v352
        %354 = vmatprep.subr.mxu0 0.0
        %v355 = vand.u32 %v193, 4294901760
        %356 = vmatpush1.msra.mxu0 %v355
        %357 = vmatprep.subr.mxu0 0.0
        %v358 = vand.u32 %v194, 4294901760
        %359 = vmatpush1.msra.mxu0 %v358
        %360 = vmatprep.subr.mxu0 0.0
        %361 = vmatpush1.msra.mxu0 0.0
        %362 = vmatprep.subr.mxu0 0.0
        %363 = vmatpush1.msra.mxu0 0.0
        %364 = vmatprep.subr.mxu0 0.0
        %365 = vmatpush1.msra.mxu0 0.0
        %366 = vmatprep.subr.mxu0 0.0
        %367 = vmatpush1.msra.mxu0 0.0
        %368 = vmatprep.subr.mxu0 0.0
        %369 = vmatpush1.msra.mxu0 0.0
        %370 = vmatprep.subr.mxu0 0.0
        %371 = vmatpush1.msra.mxu0 0.0
        %372 = vmatprep.subr.mxu0 0.0
        %373 = vmatpush1.msra.mxu0 0.0
        %374 = vmatprep.subr.mxu0 0.0
        %375 = vmatpush1.msra.mxu0 0.0
        %376 = vmatprep.subr.mxu0 0.0
        %377 = vmatpush1.msra.mxu0 0.0
        %378 = vmatprep.subr.mxu0 0.0
        %379 = vmatpush1.msra.mxu0 0.0
        %380 = vmatprep.subr.mxu0 0.0
        %381 = vmatpush1.msra.mxu0 0.0
        %382 = vmatprep.subr.mxu0 0.0
        %383 = vmatpush1.msra.mxu0 0.0
        %384 = vmatprep.subr.mxu0 0.0
        %385 = vmatpush1.msra.mxu0 0.0
        %386 = vmatprep.subr.mxu0 0.0
        %387 = vmatpush1.msra.mxu0 0.0
        %388 = vmatprep.subr.mxu0 0.0
        %389 = vmatpush1.msra.mxu0 0.0
        %390 = vmatprep.subr.mxu0 0.0
        %391 = vmatpush1.msra.mxu0 0.0
        %392 = vmatprep.subr.mxu0 0.0
        %393 = vmatpush1.msra.mxu0 0.0
        %394 = vmatprep.subr.mxu0 0.0
        %395 = vmatpush1.msra.mxu0 0.0
        %396 = vmatprep.subr.mxu0 0.0
        %397 = vmatpush1.msra.mxu0 0.0
        %398 = vmatprep.subr.mxu0 0.0
        %399 = vmatpush1.msra.mxu0 0.0
        %400 = vmatprep.subr.mxu0 0.0
        %401 = vmatpush1.msra.mxu0 0.0
        %402 = vmatprep.subr.mxu0 0.0
        %403 = vmatpush1.msra.mxu0 0.0
        %404 = vmatprep.subr.mxu0 0.0
        %405 = vmatpush1.msra.mxu0 0.0
        %406 = vmatprep.subr.mxu0 0.0
        %407 = vmatpush1.msra.mxu0 0.0
        %408 = vmatprep.subr.mxu0 0.0
        %409 = vmatpush1.msra.mxu0 0.0
        %410 = vmatprep.subr.mxu0 0.0
        %411 = vmatpush1.msra.mxu0 0.0
        %412 = vmatprep.mubr.f32.mxu0 0.0
        %v413 = vand.u32 %v295, 4294901760
        %v414 = vsub.f32 %v295, %v413
        %v415 = vand.u32 %v414, 4294901760
        %v416 = vsub.f32 %v414, %v415
        %v417 = vand.u32 %v416, 4294901760
        %418 = vmatmul.mubr.f32.gmra.mrb[0].mxu0 %v417
        %v419 = vpop.f32.mrb[0].mxu0
        %v420 = vadd.f32 0.0, %v419
        %v421 = vpop.f32.mrb[0].mxu0
        %422 = vmatprep.mubr.f32.mxu0 0.0
        %v423 = vand.u32 %v298, 4294901760
        %v424 = vsub.f32 %v298, %v423
        %v425 = vand.u32 %v424, 4294901760
        %v426 = vsub.f32 %v424, %v425
        %v427 = vand.u32 %v426, 4294901760
        %428 = vmatmul.mubr.f32.gmra.mrb[0].mxu0 %v427
        %v429 = vpop.f32.mrb[0].mxu0
        %v430 = vadd.f32 0.0, %v429
        %v431 = vpop.f32.mrb[0].mxu0
        %432 = vmatprep.mubr.f32.mxu0 0.0
        %v433 = vand.u32 %v301, 4294901760
        %v434 = vsub.f32 %v301, %v433
        %v435 = vand.u32 %v434, 4294901760
        %v436 = vsub.f32 %v434, %v435
        %v437 = vand.u32 %v436, 4294901760
        %438 = vmatmul.mubr.f32.gmra.mrb[0].mxu0 %v437
        %v439 = vpop.f32.mrb[0].mxu0
        %v440 = vadd.f32 0.0, %v439
        %v441 = vpop.f32.mrb[0].mxu0
        %442 = vmatprep.mubr.f32.mxu0 0.0
        %v443 = vand.u32 %v304, 4294901760
        %v444 = vsub.f32 %v304, %v443
        %v445 = vand.u32 %v444, 4294901760
        %v446 = vsub.f32 %v444, %v445
        %v447 = vand.u32 %v446, 4294901760
        %448 = vmatmul.mubr.f32.gmra.mrb[0].mxu0 %v447
        %v449 = vpop.f32.mrb[0].mxu0
        %v450 = vadd.f32 0.0, %v449
        %v451 = vpop.f32.mrb[0].mxu0
        %452 = vmatprep.mubr.f32.mxu0 0.0
        %v453 = vand.u32 %v307, 4294901760
        %v454 = vsub.f32 %v307, %v453
        %v455 = vand.u32 %v454, 4294901760
        %v456 = vsub.f32 %v454, %v455
        %v457 = vand.u32 %v456, 4294901760
        %458 = vmatmul.mubr.f32.gmra.mrb[0].mxu0 %v457
        %v459 = vpop.f32.mrb[0].mxu0
        %v460 = vadd.f32 0.0, %v459
        %v461 = vpop.f32.mrb[0].mxu0
        %462 = vmatprep.mubr.f32.mxu0 0.0
        %v463 = vand.u32 %v310, 4294901760
        %v464 = vsub.f32 %v310, %v463
        %v465 = vand.u32 %v464, 4294901760
        %v466 = vsub.f32 %v464, %v465
        %v467 = vand.u32 %v466, 4294901760
        %468 = vmatmul.mubr.f32.gmra.mrb[0].mxu0 %v467
        %v469 = vpop.f32.mrb[0].mxu0
        %v470 = vadd.f32 0.0, %v469
        %v471 = vpop.f32.mrb[0].mxu0
        %472 = vmatprep.mubr.f32.mxu0 0.0
        %v473 = vand.u32 %v313, 4294901760
        %v474 = vsub.f32 %v313, %v473
        %v475 = vand.u32 %v474, 4294901760
        %v476 = vsub.f32 %v474, %v475
        %v477 = vand.u32 %v476, 4294901760
        %478 = vmatmul.mubr.f32.gmra.mrb[0].mxu0 %v477
        %v479 = vpop.f32.mrb[0].mxu0
        %v480 = vadd.f32 0.0, %v479
        %v481 = vpop.f32.mrb[0].mxu0
        %482 = vmatprep.mubr.f32.mxu0 0.0
        %v483 = vand.u32 %v316, 4294901760
        %v484 = vsub.f32 %v316, %v483
        %v485 = vand.u32 %v484, 4294901760
        %v486 = vsub.f32 %v484, %v485
        %v487 = vand.u32 %v486, 4294901760
        %488 = vmatmul.mubr.f32.gmra.mrb[0].mxu0 %v487
        %v489 = vpop.f32.mrb[0].mxu0
        %v490 = vadd.f32 0.0, %v489
        %v491 = vpop.f32.mrb[0].mxu0
        %492 = vmatprep.mubr.f32.mxu0 0.0
        %v493 = vand.u32 %v319, 4294901760
        %v494 = vsub.f32 %v319, %v493
        %v495 = vand.u32 %v494, 4294901760
        %v496 = vsub.f32 %v494, %v495
        %v497 = vand.u32 %v496, 4294901760
        %498 = vmatmul.mubr.f32.gmra.mrb[0].mxu0 %v497
        %v499 = vpop.f32.mrb[0].mxu0
        %v500 = vadd.f32 0.0, %v499
        %v501 = vpop.f32.mrb[0].mxu0
        %502 = vmatprep.mubr.f32.mxu0 0.0
        %v503 = vand.u32 %v322, 4294901760
        %v504 = vsub.f32 %v322, %v503
        %v505 = vand.u32 %v504, 4294901760
        %v506 = vsub.f32 %v504, %v505
        %v507 = vand.u32 %v506, 4294901760
        %508 = vmatmul.mubr.f32.gmra.mrb[0].mxu0 %v507
        %v509 = vpop.f32.mrb[0].mxu0
        %v510 = vadd.f32 0.0, %v509
        %v511 = vpop.f32.mrb[0].mxu0
        %512 = vmatprep.mubr.f32.mxu0 0.0
        %v513 = vand.u32 %v325, 4294901760
        %v514 = vsub.f32 %v325, %v513
        %v515 = vand.u32 %v514, 4294901760
        %v516 = vsub.f32 %v514, %v515
        %v517 = vand.u32 %v516, 4294901760
        %518 = vmatmul.mubr.f32.gmra.mrb[0].mxu0 %v517
        %v519 = vpop.f32.mrb[0].mxu0
        %v520 = vadd.f32 0.0, %v519
        %v521 = vpop.f32.mrb[0].mxu0
        %522 = vmatprep.mubr.f32.mxu0 0.0
        %v523 = vand.u32 %v328, 4294901760
        %v524 = vsub.f32 %v328, %v523
        %v525 = vand.u32 %v524, 4294901760
        %v526 = vsub.f32 %v524, %v525
        %v527 = vand.u32 %v526, 4294901760
        %528 = vmatmul.mubr.f32.gmra.mrb[0].mxu0 %v527
        %v529 = vpop.f32.mrb[0].mxu0
        %v530 = vadd.f32 0.0, %v529
        %v531 = vpop.f32.mrb[0].mxu0
        %532 = vmatprep.mubr.f32.mxu0 0.0
        %v533 = vand.u32 %v331, 4294901760
        %v534 = vsub.f32 %v331, %v533
        %v535 = vand.u32 %v534, 4294901760
        %v536 = vsub.f32 %v534, %v535
        %v537 = vand.u32 %v536, 4294901760
        %538 = vmatmul.mubr.f32.gmra.mrb[0].mxu0 %v537
        %v539 = vpop.f32.mrb[0].mxu0
        %v540 = vadd.f32 0.0, %v539
        %v541 = vpop.f32.mrb[0].mxu0
        %542 = vmatprep.mubr.f32.mxu0 0.0
        %v543 = vand.u32 %v334, 4294901760
        %v544 = vsub.f32 %v334, %v543
        %v545 = vand.u32 %v544, 4294901760
        %v546 = vsub.f32 %v544, %v545
        %v547 = vand.u32 %v546, 4294901760
        %548 = vmatmul.mubr.f32.gmra.mrb[0].mxu0 %v547
        %v549 = vpop.f32.mrb[0].mxu0
        %v550 = vadd.f32 0.0, %v549
        %v551 = vpop.f32.mrb[0].mxu0
        %552 = vmatprep.mubr.f32.mxu0 0.0
        %v553 = vand.u32 %v337, 4294901760
        %v554 = vsub.f32 %v337, %v553
        %v555 = vand.u32 %v554, 4294901760
        %v556 = vsub.f32 %v554, %v555
        %v557 = vand.u32 %v556, 4294901760
        %558 = vmatmul.mubr.f32.gmra.mrb[0].mxu0 %v557
        %v559 = vpop.f32.mrb[0].mxu0
        %v560 = vadd.f32 0.0, %v559
        %v561 = vpop.f32.mrb[0].mxu0
        %562 = vmatprep.mubr.f32.mxu0 0.0
        %v563 = vand.u32 %v340, 4294901760
        %v564 = vsub.f32 %v340, %v563
        %v565 = vand.u32 %v564, 4294901760
        %v566 = vsub.f32 %v564, %v565
        %v567 = vand.u32 %v566, 4294901760
        %568 = vmatmul.mubr.f32.gmra.mrb[0].mxu0 %v567
        %v569 = vpop.f32.mrb[0].mxu0
        %v570 = vadd.f32 0.0, %v569
        %v571 = vpop.f32.mrb[0].mxu0
        %572 = vdwg.mxu0
        %573 = vmatprep.subr.mxu0 0.0
        %v574 = vand.u32 %v189, 4294901760
        %v575 = vsub.f32 %v189, %v574
        %v576 = vand.u32 %v575, 4294901760
        %v577 = vsub.f32 %v575, %v576
        %v578 = vand.u32 %v577, 4294901760
        %579 = vmatpush1.msra.mxu0 %v578
        %580 = vmatprep.subr.mxu0 0.0
        %v581 = vand.u32 %v190, 4294901760
        %v582 = vsub.f32 %v190, %v581
        %v583 = vand.u32 %v582, 4294901760
        %v584 = vsub.f32 %v582, %v583
        %v585 = vand.u32 %v584, 4294901760
        %586 = vmatpush1.msra.mxu0 %v585
        %587 = vmatprep.subr.mxu0 0.0
        %v588 = vand.u32 %v191, 4294901760
        %v589 = vsub.f32 %v191, %v588
        %v590 = vand.u32 %v589, 4294901760
        %v591 = vsub.f32 %v589, %v590
        %v592 = vand.u32 %v591, 4294901760
        %593 = vmatpush1.msra.mxu0 %v592
        %594 = vmatprep.subr.mxu0 0.0
        %v595 = vand.u32 %v192, 4294901760
        %v596 = vsub.f32 %v192, %v595
        %v597 = vand.u32 %v596, 4294901760
        %v598 = vsub.f32 %v596, %v597
        %v599 = vand.u32 %v598, 4294901760
        %600 = vmatpush1.msra.mxu0 %v599
        %601 = vmatprep.subr.mxu0 0.0
        %v602 = vand.u32 %v193, 4294901760
        %v603 = vsub.f32 %v193, %v602
        %v604 = vand.u32 %v603, 4294901760
        %v605 = vsub.f32 %v603, %v604
        %v606 = vand.u32 %v605, 4294901760
        %607 = vmatpush1.msra.mxu0 %v606
        %608 = vmatprep.subr.mxu0 0.0
        %v609 = vand.u32 %v194, 4294901760
        %v610 = vsub.f32 %v194, %v609
        %v611 = vand.u32 %v610, 4294901760
        %v612 = vsub.f32 %v610, %v611
        %v613 = vand.u32 %v612, 4294901760
        %614 = vmatpush1.msra.mxu0 %v613
        %615 = vmatprep.subr.mxu0 0.0
        %616 = vmatpush1.msra.mxu0 0.0
        %617 = vmatprep.subr.mxu0 0.0
        %618 = vmatpush1.msra.mxu0 0.0
        %619 = vmatprep.subr.mxu0 0.0
        %620 = vmatpush1.msra.mxu0 0.0
        %621 = vmatprep.subr.mxu0 0.0
        %622 = vmatpush1.msra.mxu0 0.0
        %623 = vmatprep.subr.mxu0 0.0
        %624 = vmatpush1.msra.mxu0 0.0
        %625 = vmatprep.subr.mxu0 0.0
        %626 = vmatpush1.msra.mxu0 0.0
        %627 = vmatprep.subr.mxu0 0.0
        %628 = vmatpush1.msra.mxu0 0.0
        %629 = vmatprep.subr.mxu0 0.0
        %630 = vmatpush1.msra.mxu0 0.0
        %631 = vmatprep.subr.mxu0 0.0
        %632 = vmatpush1.msra.mxu0 0.0
        %633 = vmatprep.subr.mxu0 0.0
        %634 = vmatpush1.msra.mxu0 0.0
        %635 = vmatprep.subr.mxu0 0.0
        %636 = vmatpush1.msra.mxu0 0.0
        %637 = vmatprep.subr.mxu0 0.0
        %638 = vmatpush1.msra.mxu0 0.0
        %639 = vmatprep.subr.mxu0 0.0
        %640 = vmatpush1.msra.mxu0 0.0
        %641 = vmatprep.subr.mxu0 0.0
        %642 = vmatpush1.msra.mxu0 0.0
        %643 = vmatprep.subr.mxu0 0.0
        %644 = vmatpush1.msra.mxu0 0.0
        %645 = vmatprep.subr.mxu0 0.0
        %646 = vmatpush1.msra.mxu0 0.0
        %647 = vmatprep.subr.mxu0 0.0
        %648 = vmatpush1.msra.mxu0 0.0
        %649 = vmatprep.subr.mxu0 0.0
        %650 = vmatpush1.msra.mxu0 0.0
        %651 = vmatprep.subr.mxu0 0.0
        %652 = vmatpush1.msra.mxu0 0.0
        %653 = vmatprep.subr.mxu0 0.0
        %654 = vmatpush1.msra.mxu0 0.0
        %655 = vmatprep.subr.mxu0 0.0
        %656 = vmatpush1.msra.mxu0 0.0
        %657 = vmatprep.subr.mxu0 0.0
        %658 = vmatpush1.msra.mxu0 0.0
        %659 = vmatprep.subr.mxu0 0.0
        %660 = vmatpush1.msra.mxu0 0.0
        %661 = vmatprep.subr.mxu0 0.0
        %662 = vmatpush1.msra.mxu0 0.0
        %663 = vmatprep.subr.mxu0 0.0
        %664 = vmatpush1.msra.mxu0 0.0
        %665 = vmatprep.subr.mxu0 0.0
        %666 = vmatpush1.msra.mxu0 0.0
        %667 = vmatprep.mubr.f32.mxu0 0.0
        %v668 = vand.u32 %v295, 4294901760
        %669 = vmatmul.mubr.f32.gmra.mrb[0].mxu0 %v668
        %v670 = vpop.f32.mrb[0].mxu0
        %v671 = vadd.f32 %v420, %v670
        %v672 = vpop.f32.mrb[0].mxu0
        %673 = vmatprep.mubr.f32.mxu0 0.0
        %v674 = vand.u32 %v298, 4294901760
        %675 = vmatmul.mubr.f32.gmra.mrb[0].mxu0 %v674
        %v676 = vpop.f32.mrb[0].mxu0
        %v677 = vadd.f32 %v430, %v676
        %v678 = vpop.f32.mrb[0].mxu0
        %679 = vmatprep.mubr.f32.mxu0 0.0
        %v680 = vand.u32 %v301, 4294901760
        %681 = vmatmul.mubr.f32.gmra.mrb[0].mxu0 %v680
        %v682 = vpop.f32.mrb[0].mxu0
        %v683 = vadd.f32 %v440, %v682
        %v684 = vpop.f32.mrb[0].mxu0
        %685 = vmatprep.mubr.f32.mxu0 0.0
        %v686 = vand.u32 %v304, 4294901760
        %687 = vmatmul.mubr.f32.gmra.mrb[0].mxu0 %v686
        %v688 = vpop.f32.mrb[0].mxu0
        %v689 = vadd.f32 %v450, %v688
        %v690 = vpop.f32.mrb[0].mxu0
        %691 = vmatprep.mubr.f32.mxu0 0.0
        %v692 = vand.u32 %v307, 4294901760
        %693 = vmatmul.mubr.f32.gmra.mrb[0].mxu0 %v692
        %v694 = vpop.f32.mrb[0].mxu0
        %v695 = vadd.f32 %v460, %v694
        %v696 = vpop.f32.mrb[0].mxu0
        %697 = vmatprep.mubr.f32.mxu0 0.0
        %v698 = vand.u32 %v310, 4294901760
        %699 = vmatmul.mubr.f32.gmra.mrb[0].mxu0 %v698
        %v700 = vpop.f32.mrb[0].mxu0
        %v701 = vadd.f32 %v470, %v700
        %v702 = vpop.f32.mrb[0].mxu0
        %703 = vmatprep.mubr.f32.mxu0 0.0
        %v704 = vand.u32 %v313, 4294901760
        %705 = vmatmul.mubr.f32.gmra.mrb[0].mxu0 %v704
        %v706 = vpop.f32.mrb[0].mxu0
        %v707 = vadd.f32 %v480, %v706
        %v708 = vpop.f32.mrb[0].mxu0
        %709 = vmatprep.mubr.f32.mxu0 0.0
        %v710 = vand.u32 %v316, 4294901760
        %711 = vmatmul.mubr.f32.gmra.mrb[0].mxu0 %v710
        %v712 = vpop.f32.mrb[0].mxu0
        %v713 = vadd.f32 %v490, %v712
        %v714 = vpop.f32.mrb[0].mxu0
        %715 = vmatprep.mubr.f32.mxu0 0.0
        %v716 = vand.u32 %v319, 4294901760
        %717 = vmatmul.mubr.f32.gmra.mrb[0].mxu0 %v716
        %v718 = vpop.f32.mrb[0].mxu0
        %v719 = vadd.f32 %v500, %v718
        %v720 = vpop.f32.mrb[0].mxu0
        %721 = vmatprep.mubr.f32.mxu0 0.0
        %v722 = vand.u32 %v322, 4294901760
        %723 = vmatmul.mubr.f32.gmra.mrb[0].mxu0 %v722
        %v724 = vpop.f32.mrb[0].mxu0
        %v725 = vadd.f32 %v510, %v724
        %v726 = vpop.f32.mrb[0].mxu0
        %727 = vmatprep.mubr.f32.mxu0 0.0
        %v728 = vand.u32 %v325, 4294901760
        %729 = vmatmul.mubr.f32.gmra.mrb[0].mxu0 %v728
        %v730 = vpop.f32.mrb[0].mxu0
        %v731 = vadd.f32 %v520, %v730
        %v732 = vpop.f32.mrb[0].mxu0
        %733 = vmatprep.mubr.f32.mxu0 0.0
        %v734 = vand.u32 %v328, 4294901760
        %735 = vmatmul.mubr.f32.gmra.mrb[0].mxu0 %v734
        %v736 = vpop.f32.mrb[0].mxu0
        %v737 = vadd.f32 %v530, %v736
        %v738 = vpop.f32.mrb[0].mxu0
        %739 = vmatprep.mubr.f32.mxu0 0.0
        %v740 = vand.u32 %v331, 4294901760
        %741 = vmatmul.mubr.f32.gmra.mrb[0].mxu0 %v740
        %v742 = vpop.f32.mrb[0].mxu0
        %v743 = vadd.f32 %v540, %v742
        %v744 = vpop.f32.mrb[0].mxu0
        %745 = vmatprep.mubr.f32.mxu0 0.0
        %v746 = vand.u32 %v334, 4294901760
        %747 = vmatmul.mubr.f32.gmra.mrb[0].mxu0 %v746
        %v748 = vpop.f32.mrb[0].mxu0
        %v749 = vadd.f32 %v550, %v748
        %v750 = vpop.f32.mrb[0].mxu0
        %751 = vmatprep.mubr.f32.mxu0 0.0
        %v752 = vand.u32 %v337, 4294901760
        %753 = vmatmul.mubr.f32.gmra.mrb[0].mxu0 %v752
        %v754 = vpop.f32.mrb[0].mxu0
        %v755 = vadd.f32 %v560, %v754
        %v756 = vpop.f32.mrb[0].mxu0
        %757 = vmatprep.mubr.f32.mxu0 0.0
        %v758 = vand.u32 %v340, 4294901760
        %759 = vmatmul.mubr.f32.gmra.mrb[0].mxu0 %v758
        %v760 = vpop.f32.mrb[0].mxu0
        %v761 = vadd.f32 %v570, %v760
        %v762 = vpop.f32.mrb[0].mxu0
        %763 = vdwg.mxu0
        %764 = vmatprep.subr.mxu0 0.0
        %v765 = vand.u32 %v189, 4294901760
        %v766 = vsub.f32 %v189, %v765
        %767 = vmatpush1.msra.mxu0 %v766
        %768 = vmatprep.subr.mxu0 0.0
        %v769 = vand.u32 %v190, 4294901760
        %v770 = vsub.f32 %v190, %v769
        %771 = vmatpush1.msra.mxu0 %v770
        %772 = vmatprep.subr.mxu0 0.0
        %v773 = vand.u32 %v191, 4294901760
        %v774 = vsub.f32 %v191, %v773
        %775 = vmatpush1.msra.mxu0 %v774
        %776 = vmatprep.subr.mxu0 0.0
        %v777 = vand.u32 %v192, 4294901760
        %v778 = vsub.f32 %v192, %v777
        %779 = vmatpush1.msra.mxu0 %v778
        %780 = vmatprep.subr.mxu0 0.0
        %v781 = vand.u32 %v193, 4294901760
        %v782 = vsub.f32 %v193, %v781
        %783 = vmatpush1.msra.mxu0 %v782
        %784 = vmatprep.subr.mxu0 0.0
        %v785 = vand.u32 %v194, 4294901760
        %v786 = vsub.f32 %v194, %v785
        %787 = vmatpush1.msra.mxu0 %v786
        %788 = vmatprep.subr.mxu0 0.0
        %789 = vmatpush1.msra.mxu0 0.0
        %790 = vmatprep.subr.mxu0 0.0
        %791 = vmatpush1.msra.mxu0 0.0
        %792 = vmatprep.subr.mxu0 0.0
        %793 = vmatpush1.msra.mxu0 0.0
        %794 = vmatprep.subr.mxu0 0.0
        %795 = vmatpush1.msra.mxu0 0.0
        %796 = vmatprep.subr.mxu0 0.0
        %797 = vmatpush1.msra.mxu0 0.0
        %798 = vmatprep.subr.mxu0 0.0
        %799 = vmatpush1.msra.mxu0 0.0
        %800 = vmatprep.subr.mxu0 0.0
        %801 = vmatpush1.msra.mxu0 0.0
        %802 = vmatprep.subr.mxu0 0.0
        %803 = vmatpush1.msra.mxu0 0.0
        %804 = vmatprep.subr.mxu0 0.0
        %805 = vmatpush1.msra.mxu0 0.0
        %806 = vmatprep.subr.mxu0 0.0
        %807 = vmatpush1.msra.mxu0 0.0
        %808 = vmatprep.subr.mxu0 0.0
        %809 = vmatpush1.msra.mxu0 0.0
        %810 = vmatprep.subr.mxu0 0.0
        %811 = vmatpush1.msra.mxu0 0.0
        %812 = vmatprep.subr.mxu0 0.0
        %813 = vmatpush1.msra.mxu0 0.0
        %814 = vmatprep.subr.mxu0 0.0
        %815 = vmatpush1.msra.mxu0 0.0
        %816 = vmatprep.subr.mxu0 0.0
        %817 = vmatpush1.msra.mxu0 0.0
        %818 = vmatprep.subr.mxu0 0.0
        %819 = vmatpush1.msra.mxu0 0.0
        %820 = vmatprep.subr.mxu0 0.0
        %821 = vmatpush1.msra.mxu0 0.0
        %822 = vmatprep.subr.mxu0 0.0
        %823 = vmatpush1.msra.mxu0 0.0
        %824 = vmatprep.subr.mxu0 0.0
        %825 = vmatpush1.msra.mxu0 0.0
        %826 = vmatprep.subr.mxu0 0.0
        %827 = vmatpush1.msra.mxu0 0.0
        %828 = vmatprep.subr.mxu0 0.0
        %829 = vmatpush1.msra.mxu0 0.0
        %830 = vmatprep.subr.mxu0 0.0
        %831 = vmatpush1.msra.mxu0 0.0
        %832 = vmatprep.subr.mxu0 0.0
        %833 = vmatpush1.msra.mxu0 0.0
        %834 = vmatprep.subr.mxu0 0.0
        %835 = vmatpush1.msra.mxu0 0.0
        %836 = vmatprep.subr.mxu0 0.0
        %837 = vmatpush1.msra.mxu0 0.0
        %838 = vmatprep.subr.mxu0 0.0
        %839 = vmatpush1.msra.mxu0 0.0
        %840 = vmatprep.mubr.f32.mxu0 0.0
        %v841 = vand.u32 %v295, 4294901760
        %v842 = vsub.f32 %v295, %v841
        %843 = vmatmul.mubr.f32.gmra.mrb[0].mxu0 %v842
        %v844 = vpop.f32.mrb[0].mxu0
        %v845 = vadd.f32 %v671, %v844
        %v846 = vpop.f32.mrb[0].mxu0
        %847 = vmatprep.mubr.f32.mxu0 0.0
        %v848 = vand.u32 %v298, 4294901760
        %v849 = vsub.f32 %v298, %v848
        %850 = vmatmul.mubr.f32.gmra.mrb[0].mxu0 %v849
        %v851 = vpop.f32.mrb[0].mxu0
        %v852 = vadd.f32 %v677, %v851
        %v853 = vpop.f32.mrb[0].mxu0
        %854 = vmatprep.mubr.f32.mxu0 0.0
        %v855 = vand.u32 %v301, 4294901760
        %v856 = vsub.f32 %v301, %v855
        %857 = vmatmul.mubr.f32.gmra.mrb[0].mxu0 %v856
        %v858 = vpop.f32.mrb[0].mxu0
        %v859 = vadd.f32 %v683, %v858
        %v860 = vpop.f32.mrb[0].mxu0
        %861 = vmatprep.mubr.f32.mxu0 0.0
        %v862 = vand.u32 %v304, 4294901760
        %v863 = vsub.f32 %v304, %v862
        %864 = vmatmul.mubr.f32.gmra.mrb[0].mxu0 %v863
        %v865 = vpop.f32.mrb[0].mxu0
        %v866 = vadd.f32 %v689, %v865
        %v867 = vpop.f32.mrb[0].mxu0
        %868 = vmatprep.mubr.f32.mxu0 0.0
        %v869 = vand.u32 %v307, 4294901760
        %v870 = vsub.f32 %v307, %v869
        %871 = vmatmul.mubr.f32.gmra.mrb[0].mxu0 %v870
        %v872 = vpop.f32.mrb[0].mxu0
        %v873 = vadd.f32 %v695, %v872
        %v874 = vpop.f32.mrb[0].mxu0
        %875 = vmatprep.mubr.f32.mxu0 0.0
        %v876 = vand.u32 %v310, 4294901760
        %v877 = vsub.f32 %v310, %v876
        %878 = vmatmul.mubr.f32.gmra.mrb[0].mxu0 %v877
        %v879 = vpop.f32.mrb[0].mxu0
        %v880 = vadd.f32 %v701, %v879
        %v881 = vpop.f32.mrb[0].mxu0
        %882 = vmatprep.mubr.f32.mxu0 0.0
        %v883 = vand.u32 %v313, 4294901760
        %v884 = vsub.f32 %v313, %v883
        %885 = vmatmul.mubr.f32.gmra.mrb[0].mxu0 %v884
        %v886 = vpop.f32.mrb[0].mxu0
        %v887 = vadd.f32 %v707, %v886
        %v888 = vpop.f32.mrb[0].mxu0
        %889 = vmatprep.mubr.f32.mxu0 0.0
        %v890 = vand.u32 %v316, 4294901760
        %v891 = vsub.f32 %v316, %v890
        %892 = vmatmul.mubr.f32.gmra.mrb[0].mxu0 %v891
        %v893 = vpop.f32.mrb[0].mxu0
        %v894 = vadd.f32 %v713, %v893
        %v895 = vpop.f32.mrb[0].mxu0
        %896 = vmatprep.mubr.f32.mxu0 0.0
        %v897 = vand.u32 %v319, 4294901760
        %v898 = vsub.f32 %v319, %v897
        %899 = vmatmul.mubr.f32.gmra.mrb[0].mxu0 %v898
        %v900 = vpop.f32.mrb[0].mxu0
        %v901 = vadd.f32 %v719, %v900
        %v902 = vpop.f32.mrb[0].mxu0
        %903 = vmatprep.mubr.f32.mxu0 0.0
        %v904 = vand.u32 %v322, 4294901760
        %v905 = vsub.f32 %v322, %v904
        %906 = vmatmul.mubr.f32.gmra.mrb[0].mxu0 %v905
        %v907 = vpop.f32.mrb[0].mxu0
        %v908 = vadd.f32 %v725, %v907
        %v909 = vpop.f32.mrb[0].mxu0
        %910 = vmatprep.mubr.f32.mxu0 0.0
        %v911 = vand.u32 %v325, 4294901760
        %v912 = vsub.f32 %v325, %v911
        %913 = vmatmul.mubr.f32.gmra.mrb[0].mxu0 %v912
        %v914 = vpop.f32.mrb[0].mxu0
        %v915 = vadd.f32 %v731, %v914
        %v916 = vpop.f32.mrb[0].mxu0
        %917 = vmatprep.mubr.f32.mxu0 0.0
        %v918 = vand.u32 %v328, 4294901760
        %v919 = vsub.f32 %v328, %v918
        %920 = vmatmul.mubr.f32.gmra.mrb[0].mxu0 %v919
        %v921 = vpop.f32.mrb[0].mxu0
        %v922 = vadd.f32 %v737, %v921
        %v923 = vpop.f32.mrb[0].mxu0
        %924 = vmatprep.mubr.f32.mxu0 0.0
        %v925 = vand.u32 %v331, 4294901760
        %v926 = vsub.f32 %v331, %v925
        %927 = vmatmul.mubr.f32.gmra.mrb[0].mxu0 %v926
        %v928 = vpop.f32.mrb[0].mxu0
        %v929 = vadd.f32 %v743, %v928
        %v930 = vpop.f32.mrb[0].mxu0
        %931 = vmatprep.mubr.f32.mxu0 0.0
        %v932 = vand.u32 %v334, 4294901760
        %v933 = vsub.f32 %v334, %v932
        %934 = vmatmul.mubr.f32.gmra.mrb[0].mxu0 %v933
        %v935 = vpop.f32.mrb[0].mxu0
        %v936 = vadd.f32 %v749, %v935
        %v937 = vpop.f32.mrb[0].mxu0
        %938 = vmatprep.mubr.f32.mxu0 0.0
        %v939 = vand.u32 %v337, 4294901760
        %v940 = vsub.f32 %v337, %v939
        %941 = vmatmul.mubr.f32.gmra.mrb[0].mxu0 %v940
        %v942 = vpop.f32.mrb[0].mxu0
        %v943 = vadd.f32 %v755, %v942
        %v944 = vpop.f32.mrb[0].mxu0
        %945 = vmatprep.mubr.f32.mxu0 0.0
        %v946 = vand.u32 %v340, 4294901760
        %v947 = vsub.f32 %v340, %v946
        %948 = vmatmul.mubr.f32.gmra.mrb[0].mxu0 %v947
        %v949 = vpop.f32.mrb[0].mxu0
        %v950 = vadd.f32 %v761, %v949
        %v951 = vpop.f32.mrb[0].mxu0
        %952 = vdwg.mxu0
        %953 = vmatprep.subr.mxu0 0.0
        %v954 = vand.u32 %v189, 4294901760
        %955 = vmatpush1.msra.mxu0 %v954
        %956 = vmatprep.subr.mxu0 0.0
        %v957 = vand.u32 %v190, 4294901760
        %958 = vmatpush1.msra.mxu0 %v957
        %959 = vmatprep.subr.mxu0 0.0
        %v960 = vand.u32 %v191, 4294901760
        %961 = vmatpush1.msra.mxu0 %v960
        %962 = vmatprep.subr.mxu0 0.0
        %v963 = vand.u32 %v192, 4294901760
        %964 = vmatpush1.msra.mxu0 %v963
        %965 = vmatprep.subr.mxu0 0.0
        %v966 = vand.u32 %v193, 4294901760
        %967 = vmatpush1.msra.mxu0 %v966
        %968 = vmatprep.subr.mxu0 0.0
        %v969 = vand.u32 %v194, 4294901760
        %970 = vmatpush1.msra.mxu0 %v969
        %971 = vmatprep.subr.mxu0 0.0
        %972 = vmatpush1.msra.mxu0 0.0
        %973 = vmatprep.subr.mxu0 0.0
        %974 = vmatpush1.msra.mxu0 0.0
        %975 = vmatprep.subr.mxu0 0.0
        %976 = vmatpush1.msra.mxu0 0.0
        %977 = vmatprep.subr.mxu0 0.0
        %978 = vmatpush1.msra.mxu0 0.0
        %979 = vmatprep.subr.mxu0 0.0
        %980 = vmatpush1.msra.mxu0 0.0
        %981 = vmatprep.subr.mxu0 0.0
        %982 = vmatpush1.msra.mxu0 0.0
        %983 = vmatprep.subr.mxu0 0.0
        %984 = vmatpush1.msra.mxu0 0.0
        %985 = vmatprep.subr.mxu0 0.0
        %986 = vmatpush1.msra.mxu0 0.0
        %987 = vmatprep.subr.mxu0 0.0
        %988 = vmatpush1.msra.mxu0 0.0
        %989 = vmatprep.subr.mxu0 0.0
        %990 = vmatpush1.msra.mxu0 0.0
        %991 = vmatprep.subr.mxu0 0.0
        %992 = vmatpush1.msra.mxu0 0.0
        %993 = vmatprep.subr.mxu0 0.0
        %994 = vmatpush1.msra.mxu0 0.0
        %995 = vmatprep.subr.mxu0 0.0
        %996 = vmatpush1.msra.mxu0 0.0
        %997 = vmatprep.subr.mxu0 0.0
        %998 = vmatpush1.msra.mxu0 0.0
        %999 = vmatprep.subr.mxu0 0.0
        %1000 = vmatpush1.msra.mxu0 0.0
        %1001 = vmatprep.subr.mxu0 0.0
        %1002 = vmatpush1.msra.mxu0 0.0
        %1003 = vmatprep.subr.mxu0 0.0
        %1004 = vmatpush1.msra.mxu0 0.0
        %1005 = vmatprep.subr.mxu0 0.0
        %1006 = vmatpush1.msra.mxu0 0.0
        %1007 = vmatprep.subr.mxu0 0.0
        %1008 = vmatpush1.msra.mxu0 0.0
        %1009 = vmatprep.subr.mxu0 0.0
        %1010 = vmatpush1.msra.mxu0 0.0
        %1011 = vmatprep.subr.mxu0 0.0
        %1012 = vmatpush1.msra.mxu0 0.0
        %1013 = vmatprep.subr.mxu0 0.0
        %1014 = vmatpush1.msra.mxu0 0.0
        %1015 = vmatprep.subr.mxu0 0.0
        %1016 = vmatpush1.msra.mxu0 0.0
        %1017 = vmatprep.subr.mxu0 0.0
        %1018 = vmatpush1.msra.mxu0 0.0
        %1019 = vmatprep.subr.mxu0 0.0
        %1020 = vmatpush1.msra.mxu0 0.0
        %1021 = vmatprep.subr.mxu0 0.0
        %1022 = vmatpush1.msra.mxu0 0.0
        %1023 = vmatprep.mubr.f32.mxu0 0.0
        %v1024 = vand.u32 %v295, 4294901760
        %v1025 = vsub.f32 %v295, %v1024
        %v1026 = vand.u32 %v1025, 4294901760
        %1027 = vmatmul.mubr.f32.gmra.mrb[0].mxu0 %v1026
        %v1028 = vpop.f32.mrb[0].mxu0
        %v1029 = vadd.f32 %v845, %v1028
        %v1030 = vpop.f32.mrb[0].mxu0
        %1031 = vmatprep.mubr.f32.mxu0 0.0
        %v1032 = vand.u32 %v298, 4294901760
        %v1033 = vsub.f32 %v298, %v1032
        %v1034 = vand.u32 %v1033, 4294901760
        %1035 = vmatmul.mubr.f32.gmra.mrb[0].mxu0 %v1034
        %v1036 = vpop.f32.mrb[0].mxu0
        %v1037 = vadd.f32 %v852, %v1036
        %v1038 = vpop.f32.mrb[0].mxu0
        %1039 = vmatprep.mubr.f32.mxu0 0.0
        %v1040 = vand.u32 %v301, 4294901760
        %v1041 = vsub.f32 %v301, %v1040
        %v1042 = vand.u32 %v1041, 4294901760
        %1043 = vmatmul.mubr.f32.gmra.mrb[0].mxu0 %v1042
        %v1044 = vpop.f32.mrb[0].mxu0
        %v1045 = vadd.f32 %v859, %v1044
        %v1046 = vpop.f32.mrb[0].mxu0
        %1047 = vmatprep.mubr.f32.mxu0 0.0
        %v1048 = vand.u32 %v304, 4294901760
        %v1049 = vsub.f32 %v304, %v1048
        %v1050 = vand.u32 %v1049, 4294901760
        %1051 = vmatmul.mubr.f32.gmra.mrb[0].mxu0 %v1050
        %v1052 = vpop.f32.mrb[0].mxu0
        %v1053 = vadd.f32 %v866, %v1052
        %v1054 = vpop.f32.mrb[0].mxu0
        %1055 = vmatprep.mubr.f32.mxu0 0.0
        %v1056 = vand.u32 %v307, 4294901760
        %v1057 = vsub.f32 %v307, %v1056
        %v1058 = vand.u32 %v1057, 4294901760
        %1059 = vmatmul.mubr.f32.gmra.mrb[0].mxu0 %v1058
        %v1060 = vpop.f32.mrb[0].mxu0
        %v1061 = vadd.f32 %v873, %v1060
        %v1062 = vpop.f32.mrb[0].mxu0
        %1063 = vmatprep.mubr.f32.mxu0 0.0
        %v1064 = vand.u32 %v310, 4294901760
        %v1065 = vsub.f32 %v310, %v1064
        %v1066 = vand.u32 %v1065, 4294901760
        %1067 = vmatmul.mubr.f32.gmra.mrb[0].mxu0 %v1066
        %v1068 = vpop.f32.mrb[0].mxu0
        %v1069 = vadd.f32 %v880, %v1068
        %v1070 = vpop.f32.mrb[0].mxu0
        %1071 = vmatprep.mubr.f32.mxu0 0.0
        %v1072 = vand.u32 %v313, 4294901760
        %v1073 = vsub.f32 %v313, %v1072
        %v1074 = vand.u32 %v1073, 4294901760
        %1075 = vmatmul.mubr.f32.gmra.mrb[0].mxu0 %v1074
        %v1076 = vpop.f32.mrb[0].mxu0
        %v1077 = vadd.f32 %v887, %v1076
        %v1078 = vpop.f32.mrb[0].mxu0
        %1079 = vmatprep.mubr.f32.mxu0 0.0
        %v1080 = vand.u32 %v316, 4294901760
        %v1081 = vsub.f32 %v316, %v1080
        %v1082 = vand.u32 %v1081, 4294901760
        %1083 = vmatmul.mubr.f32.gmra.mrb[0].mxu0 %v1082
        %v1084 = vpop.f32.mrb[0].mxu0
        %v1085 = vadd.f32 %v894, %v1084
        %v1086 = vpop.f32.mrb[0].mxu0
        %1087 = vmatprep.mubr.f32.mxu0 0.0
        %v1088 = vand.u32 %v319, 4294901760
        %v1089 = vsub.f32 %v319, %v1088
        %v1090 = vand.u32 %v1089, 4294901760
        %1091 = vmatmul.mubr.f32.gmra.mrb[0].mxu0 %v1090
        %v1092 = vpop.f32.mrb[0].mxu0
        %v1093 = vadd.f32 %v901, %v1092
        %v1094 = vpop.f32.mrb[0].mxu0
        %1095 = vmatprep.mubr.f32.mxu0 0.0
        %v1096 = vand.u32 %v322, 4294901760
        %v1097 = vsub.f32 %v322, %v1096
        %v1098 = vand.u32 %v1097, 4294901760
        %1099 = vmatmul.mubr.f32.gmra.mrb[0].mxu0 %v1098
        %v1100 = vpop.f32.mrb[0].mxu0
        %v1101 = vadd.f32 %v908, %v1100
        %v1102 = vpop.f32.mrb[0].mxu0
        %1103 = vmatprep.mubr.f32.mxu0 0.0
        %v1104 = vand.u32 %v325, 4294901760
        %v1105 = vsub.f32 %v325, %v1104
        %v1106 = vand.u32 %v1105, 4294901760
        %1107 = vmatmul.mubr.f32.gmra.mrb[0].mxu0 %v1106
        %v1108 = vpop.f32.mrb[0].mxu0
        %v1109 = vadd.f32 %v915, %v1108
        %v1110 = vpop.f32.mrb[0].mxu0
        %1111 = vmatprep.mubr.f32.mxu0 0.0
        %v1112 = vand.u32 %v328, 4294901760
        %v1113 = vsub.f32 %v328, %v1112
        %v1114 = vand.u32 %v1113, 4294901760
        %1115 = vmatmul.mubr.f32.gmra.mrb[0].mxu0 %v1114
        %v1116 = vpop.f32.mrb[0].mxu0
        %v1117 = vadd.f32 %v922, %v1116
        %v1118 = vpop.f32.mrb[0].mxu0
        %1119 = vmatprep.mubr.f32.mxu0 0.0
        %v1120 = vand.u32 %v331, 4294901760
        %v1121 = vsub.f32 %v331, %v1120
        %v1122 = vand.u32 %v1121, 4294901760
        %1123 = vmatmul.mubr.f32.gmra.mrb[0].mxu0 %v1122
        %v1124 = vpop.f32.mrb[0].mxu0
        %v1125 = vadd.f32 %v929, %v1124
        %v1126 = vpop.f32.mrb[0].mxu0
        %1127 = vmatprep.mubr.f32.mxu0 0.0
        %v1128 = vand.u32 %v334, 4294901760
        %v1129 = vsub.f32 %v334, %v1128
        %v1130 = vand.u32 %v1129, 4294901760
        %1131 = vmatmul.mubr.f32.gmra.mrb[0].mxu0 %v1130
        %v1132 = vpop.f32.mrb[0].mxu0
        %v1133 = vadd.f32 %v936, %v1132
        %v1134 = vpop.f32.mrb[0].mxu0
        %1135 = vmatprep.mubr.f32.mxu0 0.0
        %v1136 = vand.u32 %v337, 4294901760
        %v1137 = vsub.f32 %v337, %v1136
        %v1138 = vand.u32 %v1137, 4294901760
        %1139 = vmatmul.mubr.f32.gmra.mrb[0].mxu0 %v1138
        %v1140 = vpop.f32.mrb[0].mxu0
        %v1141 = vadd.f32 %v943, %v1140
        %v1142 = vpop.f32.mrb[0].mxu0
        %1143 = vmatprep.mubr.f32.mxu0 0.0
        %v1144 = vand.u32 %v340, 4294901760
        %v1145 = vsub.f32 %v340, %v1144
        %v1146 = vand.u32 %v1145, 4294901760
        %1147 = vmatmul.mubr.f32.gmra.mrb[0].mxu0 %v1146
        %v1148 = vpop.f32.mrb[0].mxu0
        %v1149 = vadd.f32 %v950, %v1148
        %v1150 = vpop.f32.mrb[0].mxu0
        %1151 = vdwg.mxu0
        %1152 = vmatprep.subr.mxu0 0.0
        %v1153 = vand.u32 %v189, 4294901760
        %v1154 = vsub.f32 %v189, %v1153
        %v1155 = vand.u32 %v1154, 4294901760
        %1156 = vmatpush1.msra.mxu0 %v1155
        %1157 = vmatprep.subr.mxu0 0.0
        %v1158 = vand.u32 %v190, 4294901760
        %v1159 = vsub.f32 %v190, %v1158
        %v1160 = vand.u32 %v1159, 4294901760
        %1161 = vmatpush1.msra.mxu0 %v1160
        %1162 = vmatprep.subr.mxu0 0.0
        %v1163 = vand.u32 %v191, 4294901760
        %v1164 = vsub.f32 %v191, %v1163
        %v1165 = vand.u32 %v1164, 4294901760
        %1166 = vmatpush1.msra.mxu0 %v1165
        %1167 = vmatprep.subr.mxu0 0.0
        %v1168 = vand.u32 %v192, 4294901760
        %v1169 = vsub.f32 %v192, %v1168
        %v1170 = vand.u32 %v1169, 4294901760
        %1171 = vmatpush1.msra.mxu0 %v1170
        %1172 = vmatprep.subr.mxu0 0.0
        %v1173 = vand.u32 %v193, 4294901760
        %v1174 = vsub.f32 %v193, %v1173
        %v1175 = vand.u32 %v1174, 4294901760
        %1176 = vmatpush1.msra.mxu0 %v1175
        %1177 = vmatprep.subr.mxu0 0.0
        %v1178 = vand.u32 %v194, 4294901760
        %v1179 = vsub.f32 %v194, %v1178
        %v1180 = vand.u32 %v1179, 4294901760
        %1181 = vmatpush1.msra.mxu0 %v1180
        %1182 = vmatprep.subr.mxu0 0.0
        %1183 = vmatpush1.msra.mxu0 0.0
        %1184 = vmatprep.subr.mxu0 0.0
        %1185 = vmatpush1.msra.mxu0 0.0
        %1186 = vmatprep.subr.mxu0 0.0
        %1187 = vmatpush1.msra.mxu0 0.0
        %1188 = vmatprep.subr.mxu0 0.0
        %1189 = vmatpush1.msra.mxu0 0.0
        %1190 = vmatprep.subr.mxu0 0.0
        %1191 = vmatpush1.msra.mxu0 0.0
        %1192 = vmatprep.subr.mxu0 0.0
        %1193 = vmatpush1.msra.mxu0 0.0
        %1194 = vmatprep.subr.mxu0 0.0
        %1195 = vmatpush1.msra.mxu0 0.0
        %1196 = vmatprep.subr.mxu0 0.0
        %1197 = vmatpush1.msra.mxu0 0.0
        %1198 = vmatprep.subr.mxu0 0.0
        %1199 = vmatpush1.msra.mxu0 0.0
        %1200 = vmatprep.subr.mxu0 0.0
        %1201 = vmatpush1.msra.mxu0 0.0
        %1202 = vmatprep.subr.mxu0 0.0
        %1203 = vmatpush1.msra.mxu0 0.0
        %1204 = vmatprep.subr.mxu0 0.0
        %1205 = vmatpush1.msra.mxu0 0.0
        %1206 = vmatprep.subr.mxu0 0.0
        %1207 = vmatpush1.msra.mxu0 0.0
        %1208 = vmatprep.subr.mxu0 0.0
        %1209 = vmatpush1.msra.mxu0 0.0
        %1210 = vmatprep.subr.mxu0 0.0
        %1211 = vmatpush1.msra.mxu0 0.0
        %1212 = vmatprep.subr.mxu0 0.0
        %1213 = vmatpush1.msra.mxu0 0.0
        %1214 = vmatprep.subr.mxu0 0.0
        %1215 = vmatpush1.msra.mxu0 0.0
        %1216 = vmatprep.subr.mxu0 0.0
        %1217 = vmatpush1.msra.mxu0 0.0
        %1218 = vmatprep.subr.mxu0 0.0
        %1219 = vmatpush1.msra.mxu0 0.0
        %1220 = vmatprep.subr.mxu0 0.0
        %1221 = vmatpush1.msra.mxu0 0.0
        %1222 = vmatprep.subr.mxu0 0.0
        %1223 = vmatpush1.msra.mxu0 0.0
        %1224 = vmatprep.subr.mxu0 0.0
        %1225 = vmatpush1.msra.mxu0 0.0
        %1226 = vmatprep.subr.mxu0 0.0
        %1227 = vmatpush1.msra.mxu0 0.0
        %1228 = vmatprep.subr.mxu0 0.0
        %1229 = vmatpush1.msra.mxu0 0.0
        %1230 = vmatprep.subr.mxu0 0.0
        %1231 = vmatpush1.msra.mxu0 0.0
        %1232 = vmatprep.subr.mxu0 0.0
        %1233 = vmatpush1.msra.mxu0 0.0
        %1234 = vmatprep.mubr.f32.mxu0 0.0
        %v1235 = vand.u32 %v295, 4294901760
        %1236 = vmatmul.mubr.f32.gmra.mrb[0].mxu0 %v1235
        %v1237 = vpop.f32.mrb[0].mxu0
        %v1238 = vadd.f32 %v1029, %v1237
        %v1239 = vpop.f32.mrb[0].mxu0
        %1240 = vmatprep.mubr.f32.mxu0 0.0
        %v1241 = vand.u32 %v298, 4294901760
        %1242 = vmatmul.mubr.f32.gmra.mrb[0].mxu0 %v1241
        %v1243 = vpop.f32.mrb[0].mxu0
        %v1244 = vadd.f32 %v1037, %v1243
        %v1245 = vpop.f32.mrb[0].mxu0
        %1246 = vmatprep.mubr.f32.mxu0 0.0
        %v1247 = vand.u32 %v301, 4294901760
        %1248 = vmatmul.mubr.f32.gmra.mrb[0].mxu0 %v1247
        %v1249 = vpop.f32.mrb[0].mxu0
        %v1250 = vadd.f32 %v1045, %v1249
        %v1251 = vpop.f32.mrb[0].mxu0
        %1252 = vmatprep.mubr.f32.mxu0 0.0
        %v1253 = vand.u32 %v304, 4294901760
        %1254 = vmatmul.mubr.f32.gmra.mrb[0].mxu0 %v1253
        %v1255 = vpop.f32.mrb[0].mxu0
        %v1256 = vadd.f32 %v1053, %v1255
        %v1257 = vpop.f32.mrb[0].mxu0
        %1258 = vmatprep.mubr.f32.mxu0 0.0
        %v1259 = vand.u32 %v307, 4294901760
        %1260 = vmatmul.mubr.f32.gmra.mrb[0].mxu0 %v1259
        %v1261 = vpop.f32.mrb[0].mxu0
        %v1262 = vadd.f32 %v1061, %v1261
        %v1263 = vpop.f32.mrb[0].mxu0
        %1264 = vmatprep.mubr.f32.mxu0 0.0
        %v1265 = vand.u32 %v310, 4294901760
        %1266 = vmatmul.mubr.f32.gmra.mrb[0].mxu0 %v1265
        %v1267 = vpop.f32.mrb[0].mxu0
        %v1268 = vadd.f32 %v1069, %v1267
        %v1269 = vpop.f32.mrb[0].mxu0
        %1270 = vmatprep.mubr.f32.mxu0 0.0
        %v1271 = vand.u32 %v313, 4294901760
        %1272 = vmatmul.mubr.f32.gmra.mrb[0].mxu0 %v1271
        %v1273 = vpop.f32.mrb[0].mxu0
        %v1274 = vadd.f32 %v1077, %v1273
        %v1275 = vpop.f32.mrb[0].mxu0
        %1276 = vmatprep.mubr.f32.mxu0 0.0
        %v1277 = vand.u32 %v316, 4294901760
        %1278 = vmatmul.mubr.f32.gmra.mrb[0].mxu0 %v1277
        %v1279 = vpop.f32.mrb[0].mxu0
        %v1280 = vadd.f32 %v1085, %v1279
        %v1281 = vpop.f32.mrb[0].mxu0
        %1282 = vmatprep.mubr.f32.mxu0 0.0
        %v1283 = vand.u32 %v319, 4294901760
        %1284 = vmatmul.mubr.f32.gmra.mrb[0].mxu0 %v1283
        %v1285 = vpop.f32.mrb[0].mxu0
        %v1286 = vadd.f32 %v1093, %v1285
        %v1287 = vpop.f32.mrb[0].mxu0
        %1288 = vmatprep.mubr.f32.mxu0 0.0
        %v1289 = vand.u32 %v322, 4294901760
        %1290 = vmatmul.mubr.f32.gmra.mrb[0].mxu0 %v1289
        %v1291 = vpop.f32.mrb[0].mxu0
        %v1292 = vadd.f32 %v1101, %v1291
        %v1293 = vpop.f32.mrb[0].mxu0
        %1294 = vmatprep.mubr.f32.mxu0 0.0
        %v1295 = vand.u32 %v325, 4294901760
        %1296 = vmatmul.mubr.f32.gmra.mrb[0].mxu0 %v1295
        %v1297 = vpop.f32.mrb[0].mxu0
        %v1298 = vadd.f32 %v1109, %v1297
        %v1299 = vpop.f32.mrb[0].mxu0
        %1300 = vmatprep.mubr.f32.mxu0 0.0
        %v1301 = vand.u32 %v328, 4294901760
        %1302 = vmatmul.mubr.f32.gmra.mrb[0].mxu0 %v1301
        %v1303 = vpop.f32.mrb[0].mxu0
        %v1304 = vadd.f32 %v1117, %v1303
        %v1305 = vpop.f32.mrb[0].mxu0
        %1306 = vmatprep.mubr.f32.mxu0 0.0
        %v1307 = vand.u32 %v331, 4294901760
        %1308 = vmatmul.mubr.f32.gmra.mrb[0].mxu0 %v1307
        %v1309 = vpop.f32.mrb[0].mxu0
        %v1310 = vadd.f32 %v1125, %v1309
        %v1311 = vpop.f32.mrb[0].mxu0
        %1312 = vmatprep.mubr.f32.mxu0 0.0
        %v1313 = vand.u32 %v334, 4294901760
        %1314 = vmatmul.mubr.f32.gmra.mrb[0].mxu0 %v1313
        %v1315 = vpop.f32.mrb[0].mxu0
        %v1316 = vadd.f32 %v1133, %v1315
        %v1317 = vpop.f32.mrb[0].mxu0
        %1318 = vmatprep.mubr.f32.mxu0 0.0
        %v1319 = vand.u32 %v337, 4294901760
        %1320 = vmatmul.mubr.f32.gmra.mrb[0].mxu0 %v1319
        %v1321 = vpop.f32.mrb[0].mxu0
        %v1322 = vadd.f32 %v1141, %v1321
        %v1323 = vpop.f32.mrb[0].mxu0
        %1324 = vmatprep.mubr.f32.mxu0 0.0
        %v1325 = vand.u32 %v340, 4294901760
        %1326 = vmatmul.mubr.f32.gmra.mrb[0].mxu0 %v1325
        %v1327 = vpop.f32.mrb[0].mxu0
        %v1328 = vadd.f32 %v1149, %v1327
        %v1329 = vpop.f32.mrb[0].mxu0
        %1330 = vdwg.mxu0
        %1331 = vmatprep.subr.mxu0 0.0
        %v1332 = vand.u32 %v189, 4294901760
        %1333 = vmatpush1.msra.mxu0 %v1332
        %1334 = vmatprep.subr.mxu0 0.0
        %v1335 = vand.u32 %v190, 4294901760
        %1336 = vmatpush1.msra.mxu0 %v1335
        %1337 = vmatprep.subr.mxu0 0.0
        %v1338 = vand.u32 %v191, 4294901760
        %1339 = vmatpush1.msra.mxu0 %v1338
        %1340 = vmatprep.subr.mxu0 0.0
        %v1341 = vand.u32 %v192, 4294901760
        %1342 = vmatpush1.msra.mxu0 %v1341
        %1343 = vmatprep.subr.mxu0 0.0
        %v1344 = vand.u32 %v193, 4294901760
        %1345 = vmatpush1.msra.mxu0 %v1344
        %1346 = vmatprep.subr.mxu0 0.0
        %v1347 = vand.u32 %v194, 4294901760
        %1348 = vmatpush1.msra.mxu0 %v1347
        %1349 = vmatprep.subr.mxu0 0.0
        %1350 = vmatpush1.msra.mxu0 0.0
        %1351 = vmatprep.subr.mxu0 0.0
        %1352 = vmatpush1.msra.mxu0 0.0
        %1353 = vmatprep.subr.mxu0 0.0
        %1354 = vmatpush1.msra.mxu0 0.0
        %1355 = vmatprep.subr.mxu0 0.0
        %1356 = vmatpush1.msra.mxu0 0.0
        %1357 = vmatprep.subr.mxu0 0.0
        %1358 = vmatpush1.msra.mxu0 0.0
        %1359 = vmatprep.subr.mxu0 0.0
        %1360 = vmatpush1.msra.mxu0 0.0
        %1361 = vmatprep.subr.mxu0 0.0
        %1362 = vmatpush1.msra.mxu0 0.0
        %1363 = vmatprep.subr.mxu0 0.0
        %1364 = vmatpush1.msra.mxu0 0.0
        %1365 = vmatprep.subr.mxu0 0.0
        %1366 = vmatpush1.msra.mxu0 0.0
        %1367 = vmatprep.subr.mxu0 0.0
        %1368 = vmatpush1.msra.mxu0 0.0
        %1369 = vmatprep.subr.mxu0 0.0
        %1370 = vmatpush1.msra.mxu0 0.0
        %1371 = vmatprep.subr.mxu0 0.0
        %1372 = vmatpush1.msra.mxu0 0.0
        %1373 = vmatprep.subr.mxu0 0.0
        %1374 = vmatpush1.msra.mxu0 0.0
        %1375 = vmatprep.subr.mxu0 0.0
        %1376 = vmatpush1.msra.mxu0 0.0
        %1377 = vmatprep.subr.mxu0 0.0
        %1378 = vmatpush1.msra.mxu0 0.0
        %1379 = vmatprep.subr.mxu0 0.0
        %1380 = vmatpush1.msra.mxu0 0.0
        %1381 = vmatprep.subr.mxu0 0.0
        %1382 = vmatpush1.msra.mxu0 0.0
        %1383 = vmatprep.subr.mxu0 0.0
        %1384 = vmatpush1.msra.mxu0 0.0
        %1385 = vmatprep.subr.mxu0 0.0
        %1386 = vmatpush1.msra.mxu0 0.0
        %1387 = vmatprep.subr.mxu0 0.0
        %1388 = vmatpush1.msra.mxu0 0.0
        %1389 = vmatprep.subr.mxu0 0.0
        %1390 = vmatpush1.msra.mxu0 0.0
        %1391 = vmatprep.subr.mxu0 0.0
        %1392 = vmatpush1.msra.mxu0 0.0
        %1393 = vmatprep.subr.mxu0 0.0
        %1394 = vmatpush1.msra.mxu0 0.0
        %1395 = vmatprep.subr.mxu0 0.0
        %1396 = vmatpush1.msra.mxu0 0.0
        %1397 = vmatprep.subr.mxu0 0.0
        %1398 = vmatpush1.msra.mxu0 0.0
        %1399 = vmatprep.subr.mxu0 0.0
        %1400 = vmatpush1.msra.mxu0 0.0
        %1401 = vmatprep.mubr.f32.mxu0 0.0
        %v1402 = vand.u32 %v295, 4294901760
        %1403 = vmatmul.mubr.f32.gmra.mrb[0].mxu0 %v1402
        %v1404 = vpop.f32.mrb[0].mxu0
        %v1405 = vadd.f32 %v1238, %v1404
        %v1406 = vpop.f32.mrb[0].mxu0
        %1407 = vmatprep.mubr.f32.mxu0 0.0
        %v1408 = vand.u32 %v298, 4294901760
        %1409 = vmatmul.mubr.f32.gmra.mrb[0].mxu0 %v1408
        %v1410 = vpop.f32.mrb[0].mxu0
        %v1411 = vadd.f32 %v1244, %v1410
        %v1412 = vpop.f32.mrb[0].mxu0
        %1413 = vmatprep.mubr.f32.mxu0 0.0
        %v1414 = vand.u32 %v301, 4294901760
        %1415 = vmatmul.mubr.f32.gmra.mrb[0].mxu0 %v1414
        %v1416 = vpop.f32.mrb[0].mxu0
        %v1417 = vadd.f32 %v1250, %v1416
        %v1418 = vpop.f32.mrb[0].mxu0
        %1419 = vmatprep.mubr.f32.mxu0 0.0
        %v1420 = vand.u32 %v304, 4294901760
        %1421 = vmatmul.mubr.f32.gmra.mrb[0].mxu0 %v1420
        %v1422 = vpop.f32.mrb[0].mxu0
        %v1423 = vadd.f32 %v1256, %v1422
        %v1424 = vpop.f32.mrb[0].mxu0
        %1425 = vmatprep.mubr.f32.mxu0 0.0
        %v1426 = vand.u32 %v307, 4294901760
        %1427 = vmatmul.mubr.f32.gmra.mrb[0].mxu0 %v1426
        %v1428 = vpop.f32.mrb[0].mxu0
        %v1429 = vadd.f32 %v1262, %v1428
        %v1430 = vpop.f32.mrb[0].mxu0
        %1431 = vmatprep.mubr.f32.mxu0 0.0
        %v1432 = vand.u32 %v310, 4294901760
        %1433 = vmatmul.mubr.f32.gmra.mrb[0].mxu0 %v1432
        %v1434 = vpop.f32.mrb[0].mxu0
        %v1435 = vadd.f32 %v1268, %v1434
        %v1436 = vpop.f32.mrb[0].mxu0
        %1437 = vmatprep.mubr.f32.mxu0 0.0
        %v1438 = vand.u32 %v313, 4294901760
        %1439 = vmatmul.mubr.f32.gmra.mrb[0].mxu0 %v1438
        %v1440 = vpop.f32.mrb[0].mxu0
        %v1441 = vadd.f32 %v1274, %v1440
        %v1442 = vpop.f32.mrb[0].mxu0
        %1443 = vmatprep.mubr.f32.mxu0 0.0
        %v1444 = vand.u32 %v316, 4294901760
        %1445 = vmatmul.mubr.f32.gmra.mrb[0].mxu0 %v1444
        %v1446 = vpop.f32.mrb[0].mxu0
        %v1447 = vadd.f32 %v1280, %v1446
        %v1448 = vpop.f32.mrb[0].mxu0
        %1449 = vmatprep.mubr.f32.mxu0 0.0
        %v1450 = vand.u32 %v319, 4294901760
        %1451 = vmatmul.mubr.f32.gmra.mrb[0].mxu0 %v1450
        %v1452 = vpop.f32.mrb[0].mxu0
        %v1453 = vadd.f32 %v1286, %v1452
        %v1454 = vpop.f32.mrb[0].mxu0
        %1455 = vmatprep.mubr.f32.mxu0 0.0
        %v1456 = vand.u32 %v322, 4294901760
        %1457 = vmatmul.mubr.f32.gmra.mrb[0].mxu0 %v1456
        %v1458 = vpop.f32.mrb[0].mxu0
        %v1459 = vadd.f32 %v1292, %v1458
        %v1460 = vpop.f32.mrb[0].mxu0
        %1461 = vmatprep.mubr.f32.mxu0 0.0
        %v1462 = vand.u32 %v325, 4294901760
        %1463 = vmatmul.mubr.f32.gmra.mrb[0].mxu0 %v1462
        %v1464 = vpop.f32.mrb[0].mxu0
        %v1465 = vadd.f32 %v1298, %v1464
        %v1466 = vpop.f32.mrb[0].mxu0
        %1467 = vmatprep.mubr.f32.mxu0 0.0
        %v1468 = vand.u32 %v328, 4294901760
        %1469 = vmatmul.mubr.f32.gmra.mrb[0].mxu0 %v1468
        %v1470 = vpop.f32.mrb[0].mxu0
        %v1471 = vadd.f32 %v1304, %v1470
        %v1472 = vpop.f32.mrb[0].mxu0
        %1473 = vmatprep.mubr.f32.mxu0 0.0
        %v1474 = vand.u32 %v331, 4294901760
        %1475 = vmatmul.mubr.f32.gmra.mrb[0].mxu0 %v1474
        %v1476 = vpop.f32.mrb[0].mxu0
        %v1477 = vadd.f32 %v1310, %v1476
        %v1478 = vpop.f32.mrb[0].mxu0
        %1479 = vmatprep.mubr.f32.mxu0 0.0
        %v1480 = vand.u32 %v334, 4294901760
        %1481 = vmatmul.mubr.f32.gmra.mrb[0].mxu0 %v1480
        %v1482 = vpop.f32.mrb[0].mxu0
        %v1483 = vadd.f32 %v1316, %v1482
        %v1484 = vpop.f32.mrb[0].mxu0
        %1485 = vmatprep.mubr.f32.mxu0 0.0
        %v1486 = vand.u32 %v337, 4294901760
        %1487 = vmatmul.mubr.f32.gmra.mrb[0].mxu0 %v1486
        %v1488 = vpop.f32.mrb[0].mxu0
        %v1489 = vadd.f32 %v1322, %v1488
        %v1490 = vpop.f32.mrb[0].mxu0
        %1491 = vmatprep.mubr.f32.mxu0 0.0
        %v1492 = vand.u32 %v340, 4294901760
        %1493 = vmatmul.mubr.f32.gmra.mrb[0].mxu0 %v1492
        %v1494 = vpop.f32.mrb[0].mxu0
        %v1495 = vadd.f32 %v1328, %v1494
        %v1496 = vpop.f32.mrb[0].mxu0
        %1497 = vdwg.mxu0
        %v1498 = vrot.slane %v1405, 4
        %v1499 = vadd.f32 %v1405, %v1498
        %v1500 = vrot.slane %v1499, 2
        %v1501 = vadd.f32 %v1499, %v1500
        %v1502 = vrot.slane %v1501, 1
        %v1503 = vadd.f32 %v1501, %v1502
        %v1504 = vrot.slane %v1411, 4
        %v1505 = vadd.f32 %v1411, %v1504
        %v1506 = vrot.slane %v1505, 2
        %v1507 = vadd.f32 %v1505, %v1506
        %v1508 = vrot.slane %v1507, 1
        %v1509 = vadd.f32 %v1507, %v1508
        %v1510 = vrot.slane %v1417, 4
        %v1511 = vadd.f32 %v1417, %v1510
        %v1512 = vrot.slane %v1511, 2
        %v1513 = vadd.f32 %v1511, %v1512
        %v1514 = vrot.slane %v1513, 1
        %v1515 = vadd.f32 %v1513, %v1514
        %v1516 = vrot.slane %v1423, 4
        %v1517 = vadd.f32 %v1423, %v1516
        %v1518 = vrot.slane %v1517, 2
        %v1519 = vadd.f32 %v1517, %v1518
        %v1520 = vrot.slane %v1519, 1
        %v1521 = vadd.f32 %v1519, %v1520
        %v1522 = vrot.slane %v1429, 4
        %v1523 = vadd.f32 %v1429, %v1522
        %v1524 = vrot.slane %v1523, 2
        %v1525 = vadd.f32 %v1523, %v1524
        %v1526 = vrot.slane %v1525, 1
        %v1527 = vadd.f32 %v1525, %v1526
        %v1528 = vrot.slane %v1435, 4
        %v1529 = vadd.f32 %v1435, %v1528
        %v1530 = vrot.slane %v1529, 2
        %v1531 = vadd.f32 %v1529, %v1530
        %v1532 = vrot.slane %v1531, 1
        %v1533 = vadd.f32 %v1531, %v1532
        %v1534 = vrot.slane %v1441, 4
        %v1535 = vadd.f32 %v1441, %v1534
        %v1536 = vrot.slane %v1535, 2
        %v1537 = vadd.f32 %v1535, %v1536
        %v1538 = vrot.slane %v1537, 1
        %v1539 = vadd.f32 %v1537, %v1538
        %v1540 = vrot.slane %v1447, 4
        %v1541 = vadd.f32 %v1447, %v1540
        %v1542 = vrot.slane %v1541, 2
        %v1543 = vadd.f32 %v1541, %v1542
        %v1544 = vrot.slane %v1543, 1
        %v1545 = vadd.f32 %v1543, %v1544
        %v1546 = vrot.slane %v1453, 4
        %v1547 = vadd.f32 %v1453, %v1546
        %v1548 = vrot.slane %v1547, 2
        %v1549 = vadd.f32 %v1547, %v1548
        %v1550 = vrot.slane %v1549, 1
        %v1551 = vadd.f32 %v1549, %v1550
        %v1552 = vrot.slane %v1459, 4
        %v1553 = vadd.f32 %v1459, %v1552
        %v1554 = vrot.slane %v1553, 2
        %v1555 = vadd.f32 %v1553, %v1554
        %v1556 = vrot.slane %v1555, 1
        %v1557 = vadd.f32 %v1555, %v1556
        %v1558 = vrot.slane %v1465, 4
        %v1559 = vadd.f32 %v1465, %v1558
        %v1560 = vrot.slane %v1559, 2
        %v1561 = vadd.f32 %v1559, %v1560
        %v1562 = vrot.slane %v1561, 1
        %v1563 = vadd.f32 %v1561, %v1562
        %v1564 = vrot.slane %v1471, 4
        %v1565 = vadd.f32 %v1471, %v1564
        %v1566 = vrot.slane %v1565, 2
        %v1567 = vadd.f32 %v1565, %v1566
        %v1568 = vrot.slane %v1567, 1
        %v1569 = vadd.f32 %v1567, %v1568
        %v1570 = vrot.slane %v1477, 4
        %v1571 = vadd.f32 %v1477, %v1570
        %v1572 = vrot.slane %v1571, 2
        %v1573 = vadd.f32 %v1571, %v1572
        %v1574 = vrot.slane %v1573, 1
        %v1575 = vadd.f32 %v1573, %v1574
        %v1576 = vrot.slane %v1483, 4
        %v1577 = vadd.f32 %v1483, %v1576
        %v1578 = vrot.slane %v1577, 2
        %v1579 = vadd.f32 %v1577, %v1578
        %v1580 = vrot.slane %v1579, 1
        %v1581 = vadd.f32 %v1579, %v1580
        %v1582 = vrot.slane %v1489, 4
        %v1583 = vadd.f32 %v1489, %v1582
        %v1584 = vrot.slane %v1583, 2
        %v1585 = vadd.f32 %v1583, %v1584
        %v1586 = vrot.slane %v1585, 1
        %v1587 = vadd.f32 %v1585, %v1586
        %v1588 = vrot.slane %v1495, 4
        %v1589 = vadd.f32 %v1495, %v1588
        %v1590 = vrot.slane %v1589, 2
        %v1591 = vadd.f32 %v1589, %v1590
        %v1592 = vrot.slane %v1591, 1
        %v1593 = vadd.f32 %v1591, %v1592
        %s1594 = sld [smem:[#allocation2]]
        %s1595 = sadd.f32 %s1594, 1.0
        %v1596 = vstv %s1595
        %v1597 = vmul.f32 %v1596, %v1405
        %v1598 = vmul.f32 %v1596, %v1411
        %v1599 = vmul.f32 %v1596, %v1417
        %v1600 = vmul.f32 %v1596, %v1423
        %v1601 = vmul.f32 %v1596, %v1429
        %v1602 = vmul.f32 %v1596, %v1435
        %v1603 = vmul.f32 %v1596, %v1441
        %v1604 = vmul.f32 %v1596, %v1447
        %v1605 = vmul.f32 %v1596, %v1453
        %v1606 = vmul.f32 %v1596, %v1459
        %v1607 = vmul.f32 %v1596, %v1465
        %v1608 = vmul.f32 %v1596, %v1471
        %v1609 = vmul.f32 %v1596, %v1477
        %v1610 = vmul.f32 %v1596, %v1483
        %v1611 = vmul.f32 %v1596, %v1489
        %v1612 = vmul.f32 %v1596, %v1495
        %v1613 = vadd.f32 %v1597, %v1503
        %v1614 = vadd.f32 %v1598, %v1509
        %v1615 = vadd.f32 %v1599, %v1515
        %v1616 = vadd.f32 %v1600, %v1521
        %v1617 = vadd.f32 %v1601, %v1527
        %v1618 = vadd.f32 %v1602, %v1533
        %v1619 = vadd.f32 %v1603, %v1539
        %v1620 = vadd.f32 %v1604, %v1545
        %v1621 = vadd.f32 %v1605, %v1551
        %v1622 = vadd.f32 %v1606, %v1557
        %v1623 = vadd.f32 %v1607, %v1563
        %v1624 = vadd.f32 %v1608, %v1569
        %v1625 = vadd.f32 %v1609, %v1575
        %v1626 = vadd.f32 %v1610, %v1581
        %v1627 = vadd.f32 %v1611, %v1587
        %v1628 = vadd.f32 %v1612, %v1593
        %1629 = vst [vmem:[%s165] sm:$0xff] %v1613
        %1630 = vst [vmem:[%s165 + $0x8] sm:$0xff] %v1614
        %1631 = vst [vmem:[%s165 + $0x10] sm:$0xff] %v1615
        %1632 = vst [vmem:[%s165 + $0x18] sm:$0xff] %v1616
        %1633 = vst [vmem:[%s165 + $0x20] sm:$0xff] %v1617
        %1634 = vst [vmem:[%s165 + $0x28] sm:$0xff] %v1618
        %1635 = vst [vmem:[%s165 + $0x30] sm:$0xff] %v1619
        %1636 = vst [vmem:[%s165 + $0x38] sm:$0xff] %v1620
        %1637 = vst [vmem:[%s165 + $0x40] sm:$0xff] %v1621
        %1638 = vst [vmem:[%s165 + $0x48] sm:$0xff] %v1622
        %1639 = vst [vmem:[%s165 + $0x50] sm:$0xff] %v1623
        %1640 = vst [vmem:[%s165 + $0x58] sm:$0xff] %v1624
        %1641 = vst [vmem:[%s165 + $0x60] sm:$0xff] %v1625
        %1642 = vst [vmem:[%s165 + $0x68] sm:$0xff] %v1626
        %1643 = vst [vmem:[%s165 + $0x70] sm:$0xff] %v1627
        %1644 = vst [vmem:[%s165 + $0x78] sm:$0xff] %v1628
        %s1645 = sand.u32 %s94, 1
        %s1646 = scalar_lea.sflag [#allocation4], %s1645
        %s1647 = sand.u32 %s94, 1
        %s1648 = smul.addr %s1647, 128
        %s1649 = scalar_lea.vmem [#allocation3], %s1648
        // Predicated region
        $region33: #{tpu_custom_call.1} parent=31 // pred_check
          %p1650 = pneg %p104
        $region34: #{tpu_custom_call.1} parent=31 // pred_check_branch
          %1652 = sbr.rel (%p1650) target = $region36
        $region35: #{tpu_custom_call.1} parent=31 // pred_region
          %s1653 = smul.u32 16, %s18
          %s1655 = ssub.s32 2048, 2048
          %1656 = vsyncadd %s1646, %s1655
          %s1657 = smul.addr %s1653, 128
          %s1658 = scalar_lea.hbm %s3, %s1657
          %s1659 = sshll.u32 %s1649, 4
          %s1660 = int_to_ptr.vmem [resolvable:$true] %s1659
          %1665 = dma.vmem_to_hbm [thread:$0]  %s1660, 2048, %s1658, %s1646, 128, 128, 8
        $region36: #{tpu_custom_call.1} parent=31 // pred_fallthru
          _
      $region32: #{tpu_custom_call.1} parent=5 // pred_fallthru
        _
      %p1666 = scmp.le.s32.totalorder 2, %s13
      // Predicated region
      $region37: #{tpu_custom_call.1} parent=5 // pred_check
        %p1667 = pneg %p1666
      $region38: #{tpu_custom_call.1} parent=5 // pred_check_branch
        %1669 = sbr.rel (%p1667) target = $region40
      $region39: #{tpu_custom_call.1} parent=5 // pred_region
        %s1670 = ssub.s32 %s13, 2
        // Predicated region
        $region41: #{tpu_custom_call.1} parent=39 // pred_check
          %p1671 = pneg %p110
        $region42: #{tpu_custom_call.1} parent=39 // pred_check_branch
          %1673 = sbr.rel (%p1671) target = $region44
        $region43: #{tpu_custom_call.1} parent=39 // pred_region
          %s1674 = sand.u32 %s95, 1
          %s1675 = scalar_lea.sflag [#allocation4], %s1674
          %s1676 = sand.u32 %s95, 1
          %s1677 = smul.addr %s1676, 128
          %s1678 = scalar_lea.vmem [#allocation3], %s1677
          %1679 = dma.done %s1675, 2048
        $region44: #{tpu_custom_call.1} parent=39 // pred_fallthru
          _
      $region40: #{tpu_custom_call.1} parent=5 // pred_fallthru
        _
    $region6: #{tpu_custom_call.1} parent=1 // loop_footer
      %s17 = sadd.s32 1, %s13
    $region7: #{tpu_custom_call.1} parent=1 // loop_footer_branch
      %12 = sbr.rel target = $region3
    $region8: #{tpu_custom_call.1} parent=1 // loop_exit
      _
    %1680 = vsyncpa [#allocation4], 1
    %s1681 = scalar_lea.sflag [#allocation4], 1
    %1682 = vsyncpa %s1681, 1

</llo_original>
